<compile_context>
chip_gen: v7x
topology: tpu7x:2x2x1
jax: 0.10.0
libtpu: 0.0.40
codegen_flags: <defaults>
</compile_context>

<pallas_src>
import functools

import jax
import jax.numpy as jnp
import numpy as np
from jax.experimental import pallas as pl
from jax.experimental.pallas import tpu as pltpu


# ---------------------------------------------------------------------------
# static (trace-time) helpers
# ---------------------------------------------------------------------------
def _interp_matrix_np(out_size, in_size):
    """1-D linear interpolation matrix, PyTorch align_corners=True semantics."""
    if out_size == 1 or in_size == 1:
        src = np.zeros((out_size,), np.float64)
    else:
        src = np.arange(out_size, dtype=np.float64) * ((in_size - 1) / (out_size - 1))
    i0 = np.clip(np.floor(src).astype(np.int64), 0, in_size - 1)
    i1 = np.minimum(i0 + 1, in_size - 1)
    frac = (src - i0).astype(np.float32)
    m = np.zeros((out_size, in_size), np.float32)
    m[np.arange(out_size), i0] += 1.0 - frac
    m[np.arange(out_size), i1] += frac
    return m


def _round_up(x, m):
    return -(-x // m) * m


def _vmem_capacity_bytes():
    try:
        return int(pltpu.get_tpu_info().vmem_capacity_bytes)
    except Exception:
        return 64 * 1024 * 1024          # conservative (v7x-sized) fallback


def _k1_footprint(thd, Hd, Wd, Cin, Cout, wcp, use_patch):
    """Rough per-grid-step VMEM bytes for kernel 1 (double-buffering counted)."""
    n_ht = -(-Hd // thd)
    hd_pad = n_ht * thd
    rows = _round_up(thd * Wd, 8)
    nco = _round_up(2 * Cout, 128)
    fp = 0
    # pipelined inputs (x, w6, bias, rwT): 2 buffers each (conservative).
    fp += 2 * (hd_pad + 2) * _round_up(Wd + 2, 8) * _round_up(Cin, 128) * 2
    fp += 2 * 2 * _round_up(6 * Cin, 8) * nco * 2
    fp += 2 * 8 * nco * 4
    fp += 2 * 2 * _round_up(Wd, 8) * wcp * 2
    # output block, 2 buffers.
    fp += 2 * thd * 2 * Cout * wcp * 2
    # scratches: im2col (ping-pong over row parity) or f32 conv acc; resize acc.
    if use_patch:
        fp += 2 * rows * _round_up(6 * Cin, 128) * 2
    else:
        fp += 2 * rows * nco * 4
    fp += _round_up(thd * Cout, 8) * wcp * 4
    # transient values (f32 conv out + bf16 copy, transposed slab, resize out).
    fp += rows * nco * 6
    fp += _round_up(thd * Cout, 8) * _round_up(Wd, 128) * 2
    fp += _round_up(thd * Cout, 8) * wcp * 4
    return fp


def _choose_row_tile(Hd, N, Wd, Cin, Cout, wcp, budget, use_patch):
    """Largest THd whose per-step footprint fits the VMEM budget; keep >= 2
    units of parallel grid work when N == 1 so both v7x TensorCores are used."""
    n_ht = 1 if N >= 2 else min(2, Hd)
    while True:
        thd = -(-Hd // n_ht)
        if thd <= 4 or _k1_footprint(thd, Hd, Wd, Cin, Cout, wcp, use_patch) <= budget:
            return max(thd, 1)
        n_ht += 1


def _k2_footprint(tr2, cc, H2p, wcp):
    fp = 0
    fp += 2 * _round_up(tr2, 8) * H2p * 2          # rh block  (2 buffers)
    fp += 2 * H2p * _round_up(cc, 8) * wcp * 2     # mid block (2 buffers)
    fp += 2 * cc * _round_up(tr2, 8) * wcp * 4     # out block (2 buffers)
    fp += _round_up(tr2, 8) * wcp * 4              # per-channel matmul result
    return fp


# ---------------------------------------------------------------------------
# kernel 1: subpixel (upsample-folded) conv + BN + ReLU + bilinear W-resize
# ---------------------------------------------------------------------------
def _conv_wresize_kernel(x_ref, w_ref, bias_ref, rwT_ref, o_ref,
                         scr_ref, acc_ref, *, THd, Wd, Cin, Cout, wcp, use_patch):
    """x_ref   : (1, Hd_pad+2, Wd+2, Cin)  bf16  zero-padded decoder input (NHWC)
       w_ref   : (2, 6*Cin, 2*Cout)        bf16  per-row-parity folded conv weight
       bias_ref: (1, 2*Cout)               f32   folded conv+BN bias, (b, c) order
       rwT_ref : (2, Wd, wcp)              bf16  Rw^T split by column parity
       o_ref   : (1, THd, 2, Cout, wcp)    bf16  W-resized activations
       scr_ref : (2, THd*Wd, 6*Cin) bf16  im2col ping-pong   [Cin <  128]
                 (2, THd*Wd, 2*Cout) f32  conv accumulator   [Cin >= 128]
       acc_ref : (THd*Cout, wcp)           f32   W-resize accumulator
    """
    t = pl.program_id(1)
    i0 = pl.multiple_of(t * THd, THd)
    taps = [(dy, dxp) for dy in range(2) for dxp in range(3)]

    for a in range(2):                            # output row parity
        # ---- conv (both column parities at once: RHS is 2*Cout wide) -------
        if use_patch:
            for idx, (dy, dxp) in enumerate(taps):
                scr_ref[a, :, idx * Cin:(idx + 1) * Cin] = (
                    x_ref[0, pl.ds(i0 + a + dy, THd), pl.ds(dxp, Wd), :]
                    .reshape(THd * Wd, Cin))
            y = jnp.dot(scr_ref[a], w_ref[a],
                        preferred_element_type=jnp.float32)   # (THd*Wd, 2*Cout)
        else:
            # Cin >= 128: no im2col pack traffic, 6 accumulated K=Cin matmuls.
            for idx, (dy, dxp) in enumerate(taps):
                xs = x_ref[0, pl.ds(i0 + a + dy, THd),
                           pl.ds(dxp, Wd), :].reshape(THd * Wd, Cin)
                part = jnp.dot(xs, w_ref[a, idx * Cin:(idx + 1) * Cin, :],
                               preferred_element_type=jnp.float32)
                if idx == 0:
                    scr_ref[a] = part
                else:
                    scr_ref[a] += part
            y = scr_ref[a]

        # conv bias + folded BN + ReLU (columns ordered (b, c_out)).
        y = jnp.maximum(y + bias_ref[...], 0.0).astype(jnp.bfloat16)

        # ---- bilinear W-resize (crop + lane padding folded into rwT) -------
        for b in range(2):                        # output column parity
            yb = jnp.swapaxes(
                y[:, b * Cout:(b + 1) * Cout].reshape(THd, Wd, Cout), 1, 2)
            yb = yb.reshape(THd * Cout, Wd)
            part = jnp.dot(yb, rwT_ref[b], preferred_element_type=jnp.float32)
            if b == 0:
                acc_ref[...] = part
            else:
                acc_ref[...] += part
        # lane-dense store (wcp is a multiple of 128).
        o_ref[0, :, a] = acc_ref[...].reshape(THd, Cout, wcp).astype(o_ref.dtype)


# ---------------------------------------------------------------------------
# kernel 2: bilinear H-resize, emitted directly in NCHW layout
# ---------------------------------------------------------------------------
def _hresize_kernel(rh_ref, mid_ref, o_ref, *, Cc):
    """rh_ref : (TR2, 2*Hd_pad)         bf16  cropped / zero-padded Rh
       mid_ref: (1, 2*Hd_pad, Cc, wcp)  bf16
       o_ref  : (1, Cc, TR2, wcp)       f32
    """
    for c in range(Cc):
        o_ref[0, c] = jnp.dot(rh_ref[...], mid_ref[0, :, c, :],
                              preferred_element_type=jnp.float32
                              ).astype(o_ref.dtype)


# ---------------------------------------------------------------------------
# wrapper: full _UpSampleBlock.forward
# ---------------------------------------------------------------------------
def upsample_block_forward(x_de, x_en, params, edge_opt):
    """x_de: (N, Cin, Hd, Wd), x_en: (N, Cen, He, We)  (NCHW, like PyTorch)."""
    N, Cin, Hd, Wd = x_de.shape
    _, _, He, We = x_en.shape
    Cout = Cin // 2
    H2, W2 = 2 * Hd, 2 * Wd

    if edge_opt:
        assert He >= H2 + 2 and We >= W2 + 2, \
            "edge_opt requires the encoder map to be >= (2*Hd+2, 2*Wd+2)"
        hc, wc, crop_h, crop_w = H2, W2, 2, 2
    else:
        hc, wc, crop_h, crop_w = He, We, 0, 0

    # --- static resize matrices (crop folded in) ---------------------------
    Rh = _interp_matrix_np(He, H2)[crop_h:crop_h + hc]          # (hc, H2)
    Rw = _interp_matrix_np(We, W2)[crop_w:crop_w + wc]          # (wc, W2)

    wcp = _round_up(wc, 128)                  # lane-dense output width

    # --- generation-aware VMEM budget & tiling ------------------------------
    vmem_cap = _vmem_capacity_bytes()
    vmem_limit = int(vmem_cap * 3 // 4)
    budget = int(vmem_limit * 0.6)

    use_patch = Cin < 128                     # im2col only when K is small

    THd = _choose_row_tile(Hd, N, Wd, Cin, Cout, wcp, budget, use_patch)
    n_ht = -(-Hd // THd)
    Hd_pad = n_ht * THd
    H2p = 2 * Hd_pad

    # kernel-2 channel / row tiles (Cc divides Cout; TR2 multiple of 16).
    if Cout <= 8:
        Cc = Cout
    else:
        Cc = next((c for c in (32, 16, 8) if Cout % c == 0), Cout)
    TR2 = max(16, min(_round_up(hc, 16), 256))
    while TR2 > 16 and _k2_footprint(TR2, Cc, H2p, wcp) > budget:
        TR2 -= 16
    while Cc >= 16 and Cc % 16 == 0 and _k2_footprint(TR2, Cc, H2p, wcp) > budget:
        Cc //= 2
    n_rt = -(-hc // TR2)
    hc_pad = n_rt * TR2
    n_cb = Cout // Cc

    # --- fold BN into conv weights; fold nearest-x2 upsample into taps ------
    scale = params["bn_gamma"] / jnp.sqrt(params["bn_var"] + 1e-5)
    bias = scale * (params["conv_b"] - params["bn_mean"]) + params["bn_beta"]
    w_s = params["conv_w"] * scale[:, None, None, None]          # (Cout,Cin,3,3)
    F = jnp.array([[[1., 0., 0.], [0., 1., 1.]],
                   [[1., 1., 0.], [0., 0., 1.]]], jnp.float32)   # [parity, d, k]
    # w_eff[a, b, dy, dx, ci, co]: per-parity 2x2 taps on the ORIGINAL grid.
    w_eff = jnp.einsum("ayk,bxl,oikl->abyxio", F, F, w_s)        # (2,2,2,2,Cin,Cout)

    # widened per-row-parity weight: rows (dy, dx', ci), cols (b, co).
    w6 = jnp.zeros((2, 2, 3, Cin, 2, Cout), jnp.float32)
    for a in range(2):
        for b in range(2):
            w6 = w6.at[a, :, b:b + 2, :, b, :].set(w_eff[a, b])
    w6 = w6.reshape(2, 6 * Cin, 2 * Cout).astype(jnp.bfloat16)
    bias_w = jnp.tile(bias, 2).reshape(1, 2 * Cout).astype(jnp.float32)

    # --- pad + cast the (small, original-resolution) decoder input ----------
    x_nhwc = jnp.transpose(x_de, (0, 2, 3, 1)).astype(jnp.bfloat16)
    xpad = jnp.pad(x_nhwc, ((0, 0), (1, 1 + (Hd_pad - Hd)), (1, 1), (0, 0)))

    # --- resize matrices: W split by column parity + lane pad; H zero-padded -
    rwT = np.zeros((2, Wd, wcp), np.float32)
    rwT[0, :, :wc] = Rw[:, 0::2].T
    rwT[1, :, :wc] = Rw[:, 1::2].T
    rwT = jnp.asarray(rwT, dtype=jnp.bfloat16)

    # mid rows are interleaved (2i+a); rows >= 2*Hd (zero-pad garbage) are
    # multiplied by the zero columns of rh, rows >= hc of rh are zero & cropped.
    rh = np.zeros((hc_pad, H2p), np.float32)
    rh[:hc, :H2] = Rh
    rh = jnp.asarray(rh, dtype=jnp.bfloat16)

    # --- kernel 1: conv + BN + ReLU + W-resize -------------------------------
    scr_shape = (pltpu.VMEM((2, THd * Wd, 6 * Cin), jnp.bfloat16) if use_patch
                 else pltpu.VMEM((2, THd * Wd, 2 * Cout), jnp.float32))
    k1 = functools.partial(_conv_wresize_kernel, THd=THd, Wd=Wd, Cin=Cin,
                           Cout=Cout, wcp=wcp, use_patch=use_patch)
    mid = pl.pallas_call(
        k1,
        out_shape=jax.ShapeDtypeStruct((N, Hd_pad, 2, Cout, wcp), jnp.bfloat16),
        grid_spec=pltpu.PrefetchScalarGridSpec(
            num_scalar_prefetch=0,
            grid=(N, n_ht),
            in_specs=[
                pl.BlockSpec((1, Hd_pad + 2, Wd + 2, Cin),
                             lambda n, t: (n, 0, 0, 0)),
                pl.BlockSpec((2, 6 * Cin, 2 * Cout), lambda n, t: (0, 0, 0)),
                pl.BlockSpec((1, 2 * Cout), lambda n, t: (0, 0)),
                pl.BlockSpec((2, Wd, wcp), lambda n, t: (0, 0, 0)),
            ],
            out_specs=pl.BlockSpec((1, THd, 2, Cout, wcp),
                                   lambda n, t: (n, t, 0, 0, 0)),
            scratch_shapes=[scr_shape,
                            pltpu.VMEM((THd * Cout, wcp), jnp.float32)],
        ),
        compiler_params=pltpu.CompilerParams(
            dimension_semantics=("parallel", "parallel"),
            vmem_limit_bytes=vmem_limit),
    )(xpad, w6, bias_w, rwT)

    # --- kernel 2: H-resize, emitted directly as NCHW ------------------------
    mid2 = mid.reshape(N, H2p, Cout, wcp)        # free row-major merge (i, a)
    k2 = functools.partial(_hresize_kernel, Cc=Cc)
    out2 = pl.pallas_call(
        k2,
        out_shape=jax.ShapeDtypeStruct((N, Cout, hc_pad, wcp), jnp.float32),
        grid_spec=pltpu.PrefetchScalarGridSpec(
            num_scalar_prefetch=0,
            grid=(N, n_cb, n_rt),
            in_specs=[
                pl.BlockSpec((TR2, H2p), lambda n, cb, r: (r, 0)),
                pl.BlockSpec((1, H2p, Cc, wcp), lambda n, cb, r: (n, 0, cb, 0)),
            ],
            out_specs=pl.BlockSpec((1, Cc, TR2, wcp),
                                   lambda n, cb, r: (n, cb, r, 0)),
        ),
        compiler_params=pltpu.CompilerParams(
            dimension_semantics=("parallel", "parallel", "parallel"),
            vmem_limit_bytes=vmem_limit),
    )(rh, mid2)

    # --- assemble: crop padding, crop encoder, channel concat (encoder first)
    de = out2[:, :, :hc, :wc]                    # already (N, Cout, hc, wc) NCHW
    en = x_en
    if edge_opt:
        en = en[:, :, 2:H2 + 2, 2:W2 + 2]
    return jnp.concatenate([en.astype(jnp.float32), de], axis=1)


# ---------------------------------------------------------------------------
# pure-JAX reference (for correctness check only)
# ---------------------------------------------------------------------------
def reference_forward(x_de, x_en, params, edge_opt):
    N, Cin, Hd, Wd = x_de.shape
    H2, W2 = 2 * Hd, 2 * Wd
    He, We = x_en.shape[-2:]
    xde = jnp.transpose(x_de, (0, 2, 3, 1)).astype(jnp.float32)
    xup = jnp.repeat(jnp.repeat(xde, 2, axis=1), 2, axis=2)
    conv = jax.lax.conv_general_dilated(
        xup, jnp.transpose(params["conv_w"], (2, 3, 1, 0)),
        window_strides=(1, 1), padding=((1, 1), (1, 1)),
        dimension_numbers=("NHWC", "HWIO", "NHWC"),
        precision=jax.lax.Precision.HIGHEST)
    conv = conv + params["conv_b"]
    scale = params["bn_gamma"] / jnp.sqrt(params["bn_var"] + 1e-5)
    y = jnp.maximum(scale * (conv - params["bn_mean"]) + params["bn_beta"], 0.0)
    Rh = jnp.asarray(_interp_matrix_np(He, H2))
    Rw = jnp.asarray(_interp_matrix_np(We, W2))
    de = jnp.einsum("ip,jq,npqc->nijc", Rh, Rw, y,
                    precision=jax.lax.Precision.HIGHEST)
    en = jnp.transpose(x_en, (0, 2, 3, 1)).astype(jnp.float32)
    if edge_opt:
        en = en[:, 2:H2 + 2, 2:W2 + 2, :]
        de = de[:, 2:H2 + 2, 2:W2 + 2, :]
    out = jnp.concatenate([en, de], axis=-1)
    return jnp.transpose(out, (0, 3, 1, 2))


# ---------------------------------------------------------------------------
if __name__ == "__main__":
    key = jax.random.PRNGKey(0)
    k1, k2, k3, k4, k5, k6, k7, k8 = jax.random.split(key, 8)

    # small shapes consistent with the module
    N, Cin, Hd, Wd = 2, 4, 8, 8            # decoder feature x_de
    C_en, He, We = Cin // 2, 20, 20        # encoder feature x_en
    edge_opt = True
    Cout = Cin // 2

    x_de = jax.random.normal(k1, (N, Cin, Hd, Wd), jnp.float32)
    x_en = jax.random.normal(k2, (N, C_en, He, We), jnp.float32)

    # deterministic synthetic parameters (Conv2d(Cin, Cout, 3) + BatchNorm2d)
    params = dict(
        conv_w=0.1 * jax.random.normal(k3, (Cout, Cin, 3, 3), jnp.float32),
        conv_b=0.1 * jax.random.normal(k4, (Cout,), jnp.float32),
        bn_gamma=1.0 + 0.1 * jax.random.normal(k5, (Cout,), jnp.float32),
        bn_beta=0.1 * jax.random.normal(k6, (Cout,), jnp.float32),
        bn_mean=0.1 * jax.random.normal(k7, (Cout,), jnp.float32),
        bn_var=jax.random.uniform(k8, (Cout,), jnp.float32, 0.5, 1.5),
    )

    out = upsample_block_forward(x_de, x_en, params, edge_opt)
    out = jax.block_until_ready(out)

    ref = reference_forward(x_de, x_en, params, edge_opt)
    assert out.shape == ref.shape, (out.shape, ref.shape)
    err = float(jnp.max(jnp.abs(out - ref)))
    # bf16 MXU operands (input, folded weights, resize matrices, mid tensor)
    # -> allow a few e-3 of rounding; anything structural would be O(0.1 .. 1).
    assert err < 3e-2, f"max abs error {err}"

    print("KERNEL_OK")
</pallas_src>

<mosaic_0001>
module attributes {stable_mosaic.version = 11 : i64} {
  func.func @_conv_wresize_kernel(%arg0: i32, %arg1: i32, %arg2: memref<1x10x10x4xbf16, #tpu.memory_space<vmem>>, %arg3: memref<2x24x4xbf16, #tpu.memory_space<vmem>>, %arg4: memref<1x4xf32, #tpu.memory_space<vmem>>, %arg5: memref<2x8x128xbf16, #tpu.memory_space<vmem>>, %arg6: memref<1x8x2x2x128xbf16, #tpu.memory_space<vmem>>, %arg7: memref<2x64x24xbf16, #tpu.memory_space<vmem>>, %arg8: memref<16x128xf32, #tpu.memory_space<vmem>>) attributes {dimension_semantics = [#tpu.dimension_semantics<parallel>, #tpu.dimension_semantics<parallel>], iteration_bounds = array<i64: 2, 1>, scalar_prefetch = 0 : i64, scratch_operands = 2 : i64, tpu.core_type = #tpu.core_type<tc>, window_params = [{transform_indices = @transform_0, window_bounds = array<i64: 1, 10, 10, 4>}, {pipeline_mode = #tpu.pipeline_mode<synchronous>, transform_indices = @transform_1, window_bounds = array<i64: 2, 24, 4>}, {pipeline_mode = #tpu.pipeline_mode<synchronous>, transform_indices = @transform_2, window_bounds = array<i64: 1, 4>}, {pipeline_mode = #tpu.pipeline_mode<synchronous>, transform_indices = @transform_3, window_bounds = array<i64: 2, 8, 128>}, {transform_indices = @transform_4, window_bounds = array<i64: 1, 8, 2, 2, 128>}]} {
    %c8_i32 = arith.constant 8 : i32
    %0 = arith.muli %arg1, %c8_i32 : i32
    %1 = tpu.assume_multiple %0, 8 : i32
    %c0_i32 = arith.constant 0 : i32
    %2 = arith.addi %1, %c0_i32 : i32
    %c0_i32_0 = arith.constant 0 : i32
    %3 = arith.addi %2, %c0_i32_0 : i32
    %c0 = arith.constant 0 : index
    %4 = arith.index_cast %3 : i32 to index
    %c0_1 = arith.constant 0 : index
    %c0_2 = arith.constant 0 : index
    %5 = vector.load %arg2[%c0, %4, %c0_1, %c0_2] : memref<1x10x10x4xbf16, #tpu.memory_space<vmem>>, vector<1x8x8x4xbf16>
    %6 = vector.shape_cast %5 : vector<1x8x8x4xbf16> to vector<8x8x4xbf16>
    %7 = vector.shape_cast %6 : vector<8x8x4xbf16> to vector<64x4xbf16>
    %c0_3 = arith.constant 0 : index
    %c0_4 = arith.constant 0 : index
    %c0_5 = arith.constant 0 : index
    %8 = vector.load %arg7[%c0_3, %c0_4, %c0_5] : memref<2x64x24xbf16, #tpu.memory_space<vmem>>, vector<1x64x4xbf16>
    %9 = vector.shape_cast %8 : vector<1x64x4xbf16> to vector<64x4xbf16>
    %10 = vector.shape_cast %7 : vector<64x4xbf16> to vector<1x64x4xbf16>
    tpu.vector_store %arg7[%c0_3, %c0_4, %c0_5], %10 {strides = array<i32>} : memref<2x64x24xbf16, #tpu.memory_space<vmem>>, vector<1x64x4xbf16>,
    %c0_i32_6 = arith.constant 0 : i32
    %11 = arith.addi %1, %c0_i32_6 : i32
    %c0_i32_7 = arith.constant 0 : i32
    %12 = arith.addi %11, %c0_i32_7 : i32
    %c0_8 = arith.constant 0 : index
    %13 = arith.index_cast %12 : i32 to index
    %c1 = arith.constant 1 : index
    %c0_9 = arith.constant 0 : index
    %14 = vector.load %arg2[%c0_8, %13, %c1, %c0_9] : memref<1x10x10x4xbf16, #tpu.memory_space<vmem>>, vector<1x8x8x4xbf16>
    %15 = vector.shape_cast %14 : vector<1x8x8x4xbf16> to vector<8x8x4xbf16>
    %16 = vector.shape_cast %15 : vector<8x8x4xbf16> to vector<64x4xbf16>
    %c0_10 = arith.constant 0 : index
    %c0_11 = arith.constant 0 : index
    %c4 = arith.constant 4 : index
    %17 = vector.load %arg7[%c0_10, %c0_11, %c4] : memref<2x64x24xbf16, #tpu.memory_space<vmem>>, vector<1x64x4xbf16>
    %18 = vector.shape_cast %17 : vector<1x64x4xbf16> to vector<64x4xbf16>
    %19 = vector.shape_cast %16 : vector<64x4xbf16> to vector<1x64x4xbf16>
    tpu.vector_store %arg7[%c0_10, %c0_11, %c4], %19 {strides = array<i32>} : memref<2x64x24xbf16, #tpu.memory_space<vmem>>, vector<1x64x4xbf16>,
    %c0_i32_12 = arith.constant 0 : i32
    %20 = arith.addi %1, %c0_i32_12 : i32
    %c0_i32_13 = arith.constant 0 : i32
    %21 = arith.addi %20, %c0_i32_13 : i32
    %c0_14 = arith.constant 0 : index
    %22 = arith.index_cast %21 : i32 to index
    %c2 = arith.constant 2 : index
    %c0_15 = arith.constant 0 : index
    %23 = vector.load %arg2[%c0_14, %22, %c2, %c0_15] : memref<1x10x10x4xbf16, #tpu.memory_space<vmem>>, vector<1x8x8x4xbf16>
    %24 = vector.shape_cast %23 : vector<1x8x8x4xbf16> to vector<8x8x4xbf16>
    %25 = vector.shape_cast %24 : vector<8x8x4xbf16> to vector<64x4xbf16>
    %c0_16 = arith.constant 0 : index
    %c0_17 = arith.constant 0 : index
    %c8 = arith.constant 8 : index
    %26 = vector.load %arg7[%c0_16, %c0_17, %c8] : memref<2x64x24xbf16, #tpu.memory_space<vmem>>, vector<1x64x4xbf16>
    %27 = vector.shape_cast %26 : vector<1x64x4xbf16> to vector<64x4xbf16>
    %28 = vector.shape_cast %25 : vector<64x4xbf16> to vector<1x64x4xbf16>
    tpu.vector_store %arg7[%c0_16, %c0_17, %c8], %28 {strides = array<i32>} : memref<2x64x24xbf16, #tpu.memory_space<vmem>>, vector<1x64x4xbf16>,
    %c0_i32_18 = arith.constant 0 : i32
    %29 = arith.addi %1, %c0_i32_18 : i32
    %c1_i32 = arith.constant 1 : i32
    %30 = arith.addi %29, %c1_i32 : i32
    %c0_19 = arith.constant 0 : index
    %31 = arith.index_cast %30 : i32 to index
    %c0_20 = arith.constant 0 : index
    %c0_21 = arith.constant 0 : index
    %32 = vector.load %arg2[%c0_19, %31, %c0_20, %c0_21] : memref<1x10x10x4xbf16, #tpu.memory_space<vmem>>, vector<1x8x8x4xbf16>
    %33 = vector.shape_cast %32 : vector<1x8x8x4xbf16> to vector<8x8x4xbf16>
    %34 = vector.shape_cast %33 : vector<8x8x4xbf16> to vector<64x4xbf16>
    %c0_22 = arith.constant 0 : index
    %c0_23 = arith.constant 0 : index
    %c12 = arith.constant 12 : index
    %35 = vector.load %arg7[%c0_22, %c0_23, %c12] : memref<2x64x24xbf16, #tpu.memory_space<vmem>>, vector<1x64x4xbf16>
    %36 = vector.shape_cast %35 : vector<1x64x4xbf16> to vector<64x4xbf16>
    %37 = vector.shape_cast %34 : vector<64x4xbf16> to vector<1x64x4xbf16>
    tpu.vector_store %arg7[%c0_22, %c0_23, %c12], %37 {strides = array<i32>} : memref<2x64x24xbf16, #tpu.memory_space<vmem>>, vector<1x64x4xbf16>,
    %c0_i32_24 = arith.constant 0 : i32
    %38 = arith.addi %1, %c0_i32_24 : i32
    %c1_i32_25 = arith.constant 1 : i32
    %39 = arith.addi %38, %c1_i32_25 : i32
    %c0_26 = arith.constant 0 : index
    %40 = arith.index_cast %39 : i32 to index
    %c1_27 = arith.constant 1 : index
    %c0_28 = arith.constant 0 : index
    %41 = vector.load %arg2[%c0_26, %40, %c1_27, %c0_28] : memref<1x10x10x4xbf16, #tpu.memory_space<vmem>>, vector<1x8x8x4xbf16>
    %42 = vector.shape_cast %41 : vector<1x8x8x4xbf16> to vector<8x8x4xbf16>
    %43 = vector.shape_cast %42 : vector<8x8x4xbf16> to vector<64x4xbf16>
    %c0_29 = arith.constant 0 : index
    %c0_30 = arith.constant 0 : index
    %c16 = arith.constant 16 : index
    %44 = vector.load %arg7[%c0_29, %c0_30, %c16] : memref<2x64x24xbf16, #tpu.memory_space<vmem>>, vector<1x64x4xbf16>
    %45 = vector.shape_cast %44 : vector<1x64x4xbf16> to vector<64x4xbf16>
    %46 = vector.shape_cast %43 : vector<64x4xbf16> to vector<1x64x4xbf16>
    tpu.vector_store %arg7[%c0_29, %c0_30, %c16], %46 {strides = array<i32>} : memref<2x64x24xbf16, #tpu.memory_space<vmem>>, vector<1x64x4xbf16>,
    %c0_i32_31 = arith.constant 0 : i32
    %47 = arith.addi %1, %c0_i32_31 : i32
    %c1_i32_32 = arith.constant 1 : i32
    %48 = arith.addi %47, %c1_i32_32 : i32
    %c0_33 = arith.constant 0 : index
    %49 = arith.index_cast %48 : i32 to index
    %c2_34 = arith.constant 2 : index
    %c0_35 = arith.constant 0 : index
    %50 = vector.load %arg2[%c0_33, %49, %c2_34, %c0_35] : memref<1x10x10x4xbf16, #tpu.memory_space<vmem>>, vector<1x8x8x4xbf16>
    %51 = vector.shape_cast %50 : vector<1x8x8x4xbf16> to vector<8x8x4xbf16>
    %52 = vector.shape_cast %51 : vector<8x8x4xbf16> to vector<64x4xbf16>
    %c0_36 = arith.constant 0 : index
    %c0_37 = arith.constant 0 : index
    %c20 = arith.constant 20 : index
    %53 = vector.load %arg7[%c0_36, %c0_37, %c20] : memref<2x64x24xbf16, #tpu.memory_space<vmem>>, vector<1x64x4xbf16>
    %54 = vector.shape_cast %53 : vector<1x64x4xbf16> to vector<64x4xbf16>
    %55 = vector.shape_cast %52 : vector<64x4xbf16> to vector<1x64x4xbf16>
    tpu.vector_store %arg7[%c0_36, %c0_37, %c20], %55 {strides = array<i32>} : memref<2x64x24xbf16, #tpu.memory_space<vmem>>, vector<1x64x4xbf16>,
    %c0_38 = arith.constant 0 : index
    %c0_39 = arith.constant 0 : index
    %c0_40 = arith.constant 0 : index
    %56 = vector.load %arg7[%c0_38, %c0_39, %c0_40] : memref<2x64x24xbf16, #tpu.memory_space<vmem>>, vector<1x64x24xbf16>
    %57 = vector.shape_cast %56 : vector<1x64x24xbf16> to vector<64x24xbf16>
    %c0_41 = arith.constant 0 : index
    %c0_42 = arith.constant 0 : index
    %c0_43 = arith.constant 0 : index
    %58 = vector.load %arg3[%c0_41, %c0_42, %c0_43] : memref<2x24x4xbf16, #tpu.memory_space<vmem>>, vector<1x24x4xbf16>
    %59 = vector.shape_cast %58 : vector<1x24x4xbf16> to vector<24x4xbf16>
    %cst = arith.constant dense<0.000000e+00> : vector<64x4xf32>
    %60 = tpu.matmul %57, %59, %cst {dimension_numbers = #tpu.dot_dimension_numbers<[1], [0], [0], [1], [0, 0, 1, 1], [], []>} : vector<64x24xbf16>, vector<24x4xbf16>, vector<64x4xf32> -> vector<64x4xf32>
    %c0_44 = arith.constant 0 : index
    %c0_45 = arith.constant 0 : index
    %61 = vector.load %arg4[%c0_44, %c0_45] : memref<1x4xf32, #tpu.memory_space<vmem>>, vector<1x4xf32>
    %62 = vector.broadcast %61 : vector<1x4xf32> to vector<64x4xf32>
    %63 = arith.addf %60, %62 : vector<64x4xf32>
    %cst_46 = arith.constant 0.000000e+00 : f32
    %64 = vector.broadcast %cst_46 : f32 to vector<64x4xf32>
    %65 = arith.maximumf %63, %64 : vector<64x4xf32>
    %66 = arith.truncf %65 : vector<64x4xf32> to vector<64x4xbf16>
    %67 = vector.extract_strided_slice %66 {offsets = [0, 0], sizes = [64, 2], strides = [1, 1]} : vector<64x4xbf16> to vector<64x2xbf16>
    %68 = vector.shape_cast %67 : vector<64x2xbf16> to vector<8x8x2xbf16>
    %69 = tpu.transpose %68, [0, 2, 1] : vector<8x8x2xbf16> -> vector<8x2x8xbf16>
    %70 = vector.shape_cast %69 : vector<8x2x8xbf16> to vector<16x8xbf16>
    %c0_47 = arith.constant 0 : index
    %c0_48 = arith.constant 0 : index
    %c0_49 = arith.constant 0 : index
    %71 = vector.load %arg5[%c0_47, %c0_48, %c0_49] : memref<2x8x128xbf16, #tpu.memory_space<vmem>>, vector<1x8x128xbf16>
    %72 = vector.shape_cast %71 : vector<1x8x128xbf16> to vector<8x128xbf16>
    %cst_50 = arith.constant dense<0.000000e+00> : vector<16x128xf32>
    %73 = tpu.matmul %70, %72, %cst_50 {dimension_numbers = #tpu.dot_dimension_numbers<[1], [0], [0], [1], [0, 0, 1, 1], [], []>} : vector<16x8xbf16>, vector<8x128xbf16>, vector<16x128xf32> -> vector<16x128xf32>
    %c0_51 = arith.constant 0 : index
    %c0_52 = arith.constant 0 : index
    %74 = vector.load %arg8[%c0_51, %c0_52] : memref<16x128xf32, #tpu.memory_space<vmem>>, vector<16x128xf32>
    tpu.vector_store %arg8[%c0_51, %c0_52], %73 {strides = array<i32>} : memref<16x128xf32, #tpu.memory_space<vmem>>, vector<16x128xf32>,
    %75 = vector.extract_strided_slice %66 {offsets = [0, 2], sizes = [64, 2], strides = [1, 1]} : vector<64x4xbf16> to vector<64x2xbf16>
    %76 = vector.shape_cast %75 : vector<64x2xbf16> to vector<8x8x2xbf16>
    %77 = tpu.transpose %76, [0, 2, 1] : vector<8x8x2xbf16> -> vector<8x2x8xbf16>
    %78 = vector.shape_cast %77 : vector<8x2x8xbf16> to vector<16x8xbf16>
    %c1_53 = arith.constant 1 : index
    %c0_54 = arith.constant 0 : index
    %c0_55 = arith.constant 0 : index
    %79 = vector.load %arg5[%c1_53, %c0_54, %c0_55] : memref<2x8x128xbf16, #tpu.memory_space<vmem>>, vector<1x8x128xbf16>
    %80 = vector.shape_cast %79 : vector<1x8x128xbf16> to vector<8x128xbf16>
    %cst_56 = arith.constant dense<0.000000e+00> : vector<16x128xf32>
    %81 = tpu.matmul %78, %80, %cst_56 {dimension_numbers = #tpu.dot_dimension_numbers<[1], [0], [0], [1], [0, 0, 1, 1], [], []>} : vector<16x8xbf16>, vector<8x128xbf16>, vector<16x128xf32> -> vector<16x128xf32>
    %c0_57 = arith.constant 0 : index
    %c0_58 = arith.constant 0 : index
    %82 = vector.load %arg8[%c0_57, %c0_58] : memref<16x128xf32, #tpu.memory_space<vmem>>, vector<16x128xf32>
    %83 = arith.addf %82, %81 : vector<16x128xf32>
    %c0_59 = arith.constant 0 : index
    %c0_60 = arith.constant 0 : index
    %84 = vector.load %arg8[%c0_59, %c0_60] : memref<16x128xf32, #tpu.memory_space<vmem>>, vector<16x128xf32>
    tpu.vector_store %arg8[%c0_59, %c0_60], %83 {strides = array<i32>} : memref<16x128xf32, #tpu.memory_space<vmem>>, vector<16x128xf32>,
    %c0_61 = arith.constant 0 : index
    %c0_62 = arith.constant 0 : index
    %85 = vector.load %arg8[%c0_61, %c0_62] : memref<16x128xf32, #tpu.memory_space<vmem>>, vector<16x128xf32>
    %86 = vector.shape_cast %85 : vector<16x128xf32> to vector<8x2x128xf32>
    %87 = arith.truncf %86 : vector<8x2x128xf32> to vector<8x2x128xbf16>
    %c0_63 = arith.constant 0 : index
    %c0_64 = arith.constant 0 : index
    %c0_65 = arith.constant 0 : index
    %c0_66 = arith.constant 0 : index
    %c0_67 = arith.constant 0 : index
    %88 = vector.load %arg6[%c0_63, %c0_64, %c0_65, %c0_66, %c0_67] : memref<1x8x2x2x128xbf16, #tpu.memory_space<vmem>>, vector<1x8x1x2x128xbf16>
    %89 = vector.shape_cast %88 : vector<1x8x1x2x128xbf16> to vector<8x2x128xbf16>
    %90 = vector.shape_cast %87 : vector<8x2x128xbf16> to vector<1x8x1x2x128xbf16>
    tpu.vector_store %arg6[%c0_63, %c0_64, %c0_65, %c0_66, %c0_67], %90 {strides = array<i32>} : memref<1x8x2x2x128xbf16, #tpu.memory_space<vmem>>, vector<1x8x1x2x128xbf16>,
    %c1_i32_68 = arith.constant 1 : i32
    %91 = arith.addi %1, %c1_i32_68 : i32
    %c0_i32_69 = arith.constant 0 : i32
    %92 = arith.addi %91, %c0_i32_69 : i32
    %c0_70 = arith.constant 0 : index
    %93 = arith.index_cast %92 : i32 to index
    %c0_71 = arith.constant 0 : index
    %c0_72 = arith.constant 0 : index
    %94 = vector.load %arg2[%c0_70, %93, %c0_71, %c0_72] : memref<1x10x10x4xbf16, #tpu.memory_space<vmem>>, vector<1x8x8x4xbf16>
    %95 = vector.shape_cast %94 : vector<1x8x8x4xbf16> to vector<8x8x4xbf16>
    %96 = vector.shape_cast %95 : vector<8x8x4xbf16> to vector<64x4xbf16>
    %c1_73 = arith.constant 1 : index
    %c0_74 = arith.constant 0 : index
    %c0_75 = arith.constant 0 : index
    %97 = vector.load %arg7[%c1_73, %c0_74, %c0_75] : memref<2x64x24xbf16, #tpu.memory_space<vmem>>, vector<1x64x4xbf16>
    %98 = vector.shape_cast %97 : vector<1x64x4xbf16> to vector<64x4xbf16>
    %99 = vector.shape_cast %96 : vector<64x4xbf16> to vector<1x64x4xbf16>
    tpu.vector_store %arg7[%c1_73, %c0_74, %c0_75], %99 {strides = array<i32>} : memref<2x64x24xbf16, #tpu.memory_space<vmem>>, vector<1x64x4xbf16>,
    %c1_i32_76 = arith.constant 1 : i32
    %100 = arith.addi %1, %c1_i32_76 : i32
    %c0_i32_77 = arith.constant 0 : i32
    %101 = arith.addi %100, %c0_i32_77 : i32
    %c0_78 = arith.constant 0 : index
    %102 = arith.index_cast %101 : i32 to index
    %c1_79 = arith.constant 1 : index
    %c0_80 = arith.constant 0 : index
    %103 = vector.load %arg2[%c0_78, %102, %c1_79, %c0_80] : memref<1x10x10x4xbf16, #tpu.memory_space<vmem>>, vector<1x8x8x4xbf16>
    %104 = vector.shape_cast %103 : vector<1x8x8x4xbf16> to vector<8x8x4xbf16>
    %105 = vector.shape_cast %104 : vector<8x8x4xbf16> to vector<64x4xbf16>
    %c1_81 = arith.constant 1 : index
    %c0_82 = arith.constant 0 : index
    %c4_83 = arith.constant 4 : index
    %106 = vector.load %arg7[%c1_81, %c0_82, %c4_83] : memref<2x64x24xbf16, #tpu.memory_space<vmem>>, vector<1x64x4xbf16>
    %107 = vector.shape_cast %106 : vector<1x64x4xbf16> to vector<64x4xbf16>
    %108 = vector.shape_cast %105 : vector<64x4xbf16> to vector<1x64x4xbf16>
    tpu.vector_store %arg7[%c1_81, %c0_82, %c4_83], %108 {strides = array<i32>} : memref<2x64x24xbf16, #tpu.memory_space<vmem>>, vector<1x64x4xbf16>,
    %c1_i32_84 = arith.constant 1 : i32
    %109 = arith.addi %1, %c1_i32_84 : i32
    %c0_i32_85 = arith.constant 0 : i32
    %110 = arith.addi %109, %c0_i32_85 : i32
    %c0_86 = arith.constant 0 : index
    %111 = arith.index_cast %110 : i32 to index
    %c2_87 = arith.constant 2 : index
    %c0_88 = arith.constant 0 : index
    %112 = vector.load %arg2[%c0_86, %111, %c2_87, %c0_88] : memref<1x10x10x4xbf16, #tpu.memory_space<vmem>>, vector<1x8x8x4xbf16>
    %113 = vector.shape_cast %112 : vector<1x8x8x4xbf16> to vector<8x8x4xbf16>
    %114 = vector.shape_cast %113 : vector<8x8x4xbf16> to vector<64x4xbf16>
    %c1_89 = arith.constant 1 : index
    %c0_90 = arith.constant 0 : index
    %c8_91 = arith.constant 8 : index
    %115 = vector.load %arg7[%c1_89, %c0_90, %c8_91] : memref<2x64x24xbf16, #tpu.memory_space<vmem>>, vector<1x64x4xbf16>
    %116 = vector.shape_cast %115 : vector<1x64x4xbf16> to vector<64x4xbf16>
    %117 = vector.shape_cast %114 : vector<64x4xbf16> to vector<1x64x4xbf16>
    tpu.vector_store %arg7[%c1_89, %c0_90, %c8_91], %117 {strides = array<i32>} : memref<2x64x24xbf16, #tpu.memory_space<vmem>>, vector<1x64x4xbf16>,
    %c1_i32_92 = arith.constant 1 : i32
    %118 = arith.addi %1, %c1_i32_92 : i32
    %c1_i32_93 = arith.constant 1 : i32
    %119 = arith.addi %118, %c1_i32_93 : i32
    %c0_94 = arith.constant 0 : index
    %120 = arith.index_cast %119 : i32 to index
    %c0_95 = arith.constant 0 : index
    %c0_96 = arith.constant 0 : index
    %121 = vector.load %arg2[%c0_94, %120, %c0_95, %c0_96] : memref<1x10x10x4xbf16, #tpu.memory_space<vmem>>, vector<1x8x8x4xbf16>
    %122 = vector.shape_cast %121 : vector<1x8x8x4xbf16> to vector<8x8x4xbf16>
    %123 = vector.shape_cast %122 : vector<8x8x4xbf16> to vector<64x4xbf16>
    %c1_97 = arith.constant 1 : index
    %c0_98 = arith.constant 0 : index
    %c12_99 = arith.constant 12 : index
    %124 = vector.load %arg7[%c1_97, %c0_98, %c12_99] : memref<2x64x24xbf16, #tpu.memory_space<vmem>>, vector<1x64x4xbf16>
    %125 = vector.shape_cast %124 : vector<1x64x4xbf16> to vector<64x4xbf16>
    %126 = vector.shape_cast %123 : vector<64x4xbf16> to vector<1x64x4xbf16>
    tpu.vector_store %arg7[%c1_97, %c0_98, %c12_99], %126 {strides = array<i32>} : memref<2x64x24xbf16, #tpu.memory_space<vmem>>, vector<1x64x4xbf16>,
    %c1_i32_100 = arith.constant 1 : i32
    %127 = arith.addi %1, %c1_i32_100 : i32
    %c1_i32_101 = arith.constant 1 : i32
    %128 = arith.addi %127, %c1_i32_101 : i32
    %c0_102 = arith.constant 0 : index
    %129 = arith.index_cast %128 : i32 to index
    %c1_103 = arith.constant 1 : index
    %c0_104 = arith.constant 0 : index
    %130 = vector.load %arg2[%c0_102, %129, %c1_103, %c0_104] : memref<1x10x10x4xbf16, #tpu.memory_space<vmem>>, vector<1x8x8x4xbf16>
    %131 = vector.shape_cast %130 : vector<1x8x8x4xbf16> to vector<8x8x4xbf16>
    %132 = vector.shape_cast %131 : vector<8x8x4xbf16> to vector<64x4xbf16>
    %c1_105 = arith.constant 1 : index
    %c0_106 = arith.constant 0 : index
    %c16_107 = arith.constant 16 : index
    %133 = vector.load %arg7[%c1_105, %c0_106, %c16_107] : memref<2x64x24xbf16, #tpu.memory_space<vmem>>, vector<1x64x4xbf16>
    %134 = vector.shape_cast %133 : vector<1x64x4xbf16> to vector<64x4xbf16>
    %135 = vector.shape_cast %132 : vector<64x4xbf16> to vector<1x64x4xbf16>
    tpu.vector_store %arg7[%c1_105, %c0_106, %c16_107], %135 {strides = array<i32>} : memref<2x64x24xbf16, #tpu.memory_space<vmem>>, vector<1x64x4xbf16>,
    %c1_i32_108 = arith.constant 1 : i32
    %136 = arith.addi %1, %c1_i32_108 : i32
    %c1_i32_109 = arith.constant 1 : i32
    %137 = arith.addi %136, %c1_i32_109 : i32
    %c0_110 = arith.constant 0 : index
    %138 = arith.index_cast %137 : i32 to index
    %c2_111 = arith.constant 2 : index
    %c0_112 = arith.constant 0 : index
    %139 = vector.load %arg2[%c0_110, %138, %c2_111, %c0_112] : memref<1x10x10x4xbf16, #tpu.memory_space<vmem>>, vector<1x8x8x4xbf16>
    %140 = vector.shape_cast %139 : vector<1x8x8x4xbf16> to vector<8x8x4xbf16>
    %141 = vector.shape_cast %140 : vector<8x8x4xbf16> to vector<64x4xbf16>
    %c1_113 = arith.constant 1 : index
    %c0_114 = arith.constant 0 : index
    %c20_115 = arith.constant 20 : index
    %142 = vector.load %arg7[%c1_113, %c0_114, %c20_115] : memref<2x64x24xbf16, #tpu.memory_space<vmem>>, vector<1x64x4xbf16>
    %143 = vector.shape_cast %142 : vector<1x64x4xbf16> to vector<64x4xbf16>
    %144 = vector.shape_cast %141 : vector<64x4xbf16> to vector<1x64x4xbf16>
    tpu.vector_store %arg7[%c1_113, %c0_114, %c20_115], %144 {strides = array<i32>} : memref<2x64x24xbf16, #tpu.memory_space<vmem>>, vector<1x64x4xbf16>,
    %c1_116 = arith.constant 1 : index
    %c0_117 = arith.constant 0 : index
    %c0_118 = arith.constant 0 : index
    %145 = vector.load %arg7[%c1_116, %c0_117, %c0_118] : memref<2x64x24xbf16, #tpu.memory_space<vmem>>, vector<1x64x24xbf16>
    %146 = vector.shape_cast %145 : vector<1x64x24xbf16> to vector<64x24xbf16>
    %c1_119 = arith.constant 1 : index
    %c0_120 = arith.constant 0 : index
    %c0_121 = arith.constant 0 : index
    %147 = vector.load %arg3[%c1_119, %c0_120, %c0_121] : memref<2x24x4xbf16, #tpu.memory_space<vmem>>, vector<1x24x4xbf16>
    %148 = vector.shape_cast %147 : vector<1x24x4xbf16> to vector<24x4xbf16>
    %cst_122 = arith.constant dense<0.000000e+00> : vector<64x4xf32>
    %149 = tpu.matmul %146, %148, %cst_122 {dimension_numbers = #tpu.dot_dimension_numbers<[1], [0], [0], [1], [0, 0, 1, 1], [], []>} : vector<64x24xbf16>, vector<24x4xbf16>, vector<64x4xf32> -> vector<64x4xf32>
    %c0_123 = arith.constant 0 : index
    %c0_124 = arith.constant 0 : index
    %150 = vector.load %arg4[%c0_123, %c0_124] : memref<1x4xf32, #tpu.memory_space<vmem>>, vector<1x4xf32>
    %151 = vector.broadcast %150 : vector<1x4xf32> to vector<64x4xf32>
    %152 = arith.addf %149, %151 : vector<64x4xf32>
    %cst_125 = arith.constant 0.000000e+00 : f32
    %153 = vector.broadcast %cst_125 : f32 to vector<64x4xf32>
    %154 = arith.maximumf %152, %153 : vector<64x4xf32>
    %155 = arith.truncf %154 : vector<64x4xf32> to vector<64x4xbf16>
    %156 = vector.extract_strided_slice %155 {offsets = [0, 0], sizes = [64, 2], strides = [1, 1]} : vector<64x4xbf16> to vector<64x2xbf16>
    %157 = vector.shape_cast %156 : vector<64x2xbf16> to vector<8x8x2xbf16>
    %158 = tpu.transpose %157, [0, 2, 1] : vector<8x8x2xbf16> -> vector<8x2x8xbf16>
    %159 = vector.shape_cast %158 : vector<8x2x8xbf16> to vector<16x8xbf16>
    %c0_126 = arith.constant 0 : index
    %c0_127 = arith.constant 0 : index
    %c0_128 = arith.constant 0 : index
    %160 = vector.load %arg5[%c0_126, %c0_127, %c0_128] : memref<2x8x128xbf16, #tpu.memory_space<vmem>>, vector<1x8x128xbf16>
    %161 = vector.shape_cast %160 : vector<1x8x128xbf16> to vector<8x128xbf16>
    %cst_129 = arith.constant dense<0.000000e+00> : vector<16x128xf32>
    %162 = tpu.matmul %159, %161, %cst_129 {dimension_numbers = #tpu.dot_dimension_numbers<[1], [0], [0], [1], [0, 0, 1, 1], [], []>} : vector<16x8xbf16>, vector<8x128xbf16>, vector<16x128xf32> -> vector<16x128xf32>
    %c0_130 = arith.constant 0 : index
    %c0_131 = arith.constant 0 : index
    %163 = vector.load %arg8[%c0_130, %c0_131] : memref<16x128xf32, #tpu.memory_space<vmem>>, vector<16x128xf32>
    tpu.vector_store %arg8[%c0_130, %c0_131], %162 {strides = array<i32>} : memref<16x128xf32, #tpu.memory_space<vmem>>, vector<16x128xf32>,
    %164 = vector.extract_strided_slice %155 {offsets = [0, 2], sizes = [64, 2], strides = [1, 1]} : vector<64x4xbf16> to vector<64x2xbf16>
    %165 = vector.shape_cast %164 : vector<64x2xbf16> to vector<8x8x2xbf16>
    %166 = tpu.transpose %165, [0, 2, 1] : vector<8x8x2xbf16> -> vector<8x2x8xbf16>
    %167 = vector.shape_cast %166 : vector<8x2x8xbf16> to vector<16x8xbf16>
    %c1_132 = arith.constant 1 : index
    %c0_133 = arith.constant 0 : index
    %c0_134 = arith.constant 0 : index
    %168 = vector.load %arg5[%c1_132, %c0_133, %c0_134] : memref<2x8x128xbf16, #tpu.memory_space<vmem>>, vector<1x8x128xbf16>
    %169 = vector.shape_cast %168 : vector<1x8x128xbf16> to vector<8x128xbf16>
    %cst_135 = arith.constant dense<0.000000e+00> : vector<16x128xf32>
    %170 = tpu.matmul %167, %169, %cst_135 {dimension_numbers = #tpu.dot_dimension_numbers<[1], [0], [0], [1], [0, 0, 1, 1], [], []>} : vector<16x8xbf16>, vector<8x128xbf16>, vector<16x128xf32> -> vector<16x128xf32>
    %c0_136 = arith.constant 0 : index
    %c0_137 = arith.constant 0 : index
    %171 = vector.load %arg8[%c0_136, %c0_137] : memref<16x128xf32, #tpu.memory_space<vmem>>, vector<16x128xf32>
    %172 = arith.addf %171, %170 : vector<16x128xf32>
    %c0_138 = arith.constant 0 : index
    %c0_139 = arith.constant 0 : index
    %173 = vector.load %arg8[%c0_138, %c0_139] : memref<16x128xf32, #tpu.memory_space<vmem>>, vector<16x128xf32>
    tpu.vector_store %arg8[%c0_138, %c0_139], %172 {strides = array<i32>} : memref<16x128xf32, #tpu.memory_space<vmem>>, vector<16x128xf32>,
    %c0_140 = arith.constant 0 : index
    %c0_141 = arith.constant 0 : index
    %174 = vector.load %arg8[%c0_140, %c0_141] : memref<16x128xf32, #tpu.memory_space<vmem>>, vector<16x128xf32>
    %175 = vector.shape_cast %174 : vector<16x128xf32> to vector<8x2x128xf32>
    %176 = arith.truncf %175 : vector<8x2x128xf32> to vector<8x2x128xbf16>
    %c0_142 = arith.constant 0 : index
    %c0_143 = arith.constant 0 : index
    %c1_144 = arith.constant 1 : index
    %c0_145 = arith.constant 0 : index
    %c0_146 = arith.constant 0 : index
    %177 = vector.load %arg6[%c0_142, %c0_143, %c1_144, %c0_145, %c0_146] : memref<1x8x2x2x128xbf16, #tpu.memory_space<vmem>>, vector<1x8x1x2x128xbf16>
    %178 = vector.shape_cast %177 : vector<1x8x1x2x128xbf16> to vector<8x2x128xbf16>
    %179 = vector.shape_cast %176 : vector<8x2x128xbf16> to vector<1x8x1x2x128xbf16>
    tpu.vector_store %arg6[%c0_142, %c0_143, %c1_144, %c0_145, %c0_146], %179 {strides = array<i32>} : memref<1x8x2x2x128xbf16, #tpu.memory_space<vmem>>, vector<1x8x1x2x128xbf16>,
    return
  }
  func.func @transform_0(%arg0: i32, %arg1: i32) -> (i32, i32, i32, i32) {
    %c0_i32 = arith.constant 0 : i32
    %c0_i32_0 = arith.constant 0 : i32
    %c0_i32_1 = arith.constant 0 : i32
    %c0_i32_2 = arith.constant 0 : i32
    return %arg0, %c0_i32, %c0_i32_0, %c0_i32_1 : i32, i32, i32, i32
  }
  func.func @transform_1(%arg0: i32, %arg1: i32) -> (i32, i32, i32) {
    %c0_i32 = arith.constant 0 : i32
    %c0_i32_0 = arith.constant 0 : i32
    %c0_i32_1 = arith.constant 0 : i32
    %c0_i32_2 = arith.constant 0 : i32
    return %c0_i32, %c0_i32_0, %c0_i32_1 : i32, i32, i32
  }
  func.func @transform_2(%arg0: i32, %arg1: i32) -> (i32, i32) {
    %c0_i32 = arith.constant 0 : i32
    %c0_i32_0 = arith.constant 0 : i32
    %c0_i32_1 = arith.constant 0 : i32
    return %c0_i32, %c0_i32_0 : i32, i32
  }
  func.func @transform_3(%arg0: i32, %arg1: i32) -> (i32, i32, i32) {
    %c0_i32 = arith.constant 0 : i32
    %c0_i32_0 = arith.constant 0 : i32
    %c0_i32_1 = arith.constant 0 : i32
    %c0_i32_2 = arith.constant 0 : i32
    return %c0_i32, %c0_i32_0, %c0_i32_1 : i32, i32, i32
  }
  func.func @transform_4(%arg0: i32, %arg1: i32) -> (i32, i32, i32, i32, i32) {
    %c0_i32 = arith.constant 0 : i32
    %c0_i32_0 = arith.constant 0 : i32
    %c0_i32_1 = arith.constant 0 : i32
    %c0_i32_2 = arith.constant 0 : i32
    return %arg0, %arg1, %c0_i32, %c0_i32_0, %c0_i32_1 : i32, i32, i32, i32, i32
  }
}

</mosaic_0001>

<llo_original>
// kernel: tpu_custom_call.1
$region0: #{tpu_custom_call.1}
  #allocation0 [shape = 'u32[]', space=smem, size = 0x4, offset = 0x4, fixed_abs, tag = 'smem constant byte address 0x4 - core index']
  #allocation1 [shape = 'u32[144,128]{1,0:T(1,128)}', space=vmem, size = 0x12000, scoped, tag = 'internal scratch']
  #allocation2 [shape = 'bf16[2,64,24]{2,1,0:T(16,128)(2,1)}', space=vmem, size = 0x8000, scoped, tag = 'scratch operand']
  #allocation3 [shape = 'f32[16,128]{1,0:T(8,128)}', space=vmem, size = 0x2000, scoped, tag = 'scratch operand']
  %s0 = inlined_call_operand.vmem [shape: bf16[2,10,10,4], index: 0, kind: input, shape index: {}]
  %s1 = inlined_call_operand.vmem [shape: bf16[2,24,4], index: 1, kind: input, shape index: {}]
  %s2 = inlined_call_operand.vmem [shape: f32[1,4], index: 2, kind: input, shape index: {}]
  %s3 = inlined_call_operand.vmem [shape: bf16[2,8,128], index: 3, kind: input, shape index: {}]
  %s4 = inlined_call_operand.hbm [shape: bf16[2,8,2,2,128], index: 4, kind: output, shape index: {}]
  %s5 = sld [smem:[#allocation0]]
  $region49: #{tpu_custom_call.1} parent=0
    _
  %s7 = ssub.s32 1, %s5
  %s8 = scalar_select 0, %s7, %s5
  $region1: #{tpu_custom_call.1} parent=0
    #allocation4 [shape = 'u8[16384]{0}', space=vmem, size = 0x4000, scoped, tag = 'output window, operand 0']
    #allocation5 [shape = 's32[2]{0}', space=sflag, size = 0x8, scoped, tag = 'scoped memory for tpu_custom_call.1']
    %9 = vsyncpa [#allocation5], 0
    %s10 = scalar_lea.sflag [#allocation5], 1
    %11 = vsyncpa %s10, 0
    loop: start=0, step=1, limit=4
    $region2: #{tpu_custom_call.1} parent=1 // loop_pre_header
      _
    $region3: #{tpu_custom_call.1} parent=1 // loop_header
      %s13 = sphi 0, %s17
      %p14 = scmp.ge.s32.totalorder %s13, 4
      %s20 = sphi 0, %s32
      %s21 = sphi 0, %s28
      %s22 = sphi 0, %s20
      %s23 = sphi 0, %s21
      %s24 = sphi 0, %s22
      %s25 = sphi 0, %s23
      %s35 = sphi 0, %s37
      %s38 = sphi 0, %s35
      %s39 = sphi 0, %s38
      %s55 = sphi 0, %s39
      %s59 = sphi 0, %s59
      %s61 = sphi 0, %s59
      %s62 = sphi 0, %s61
      %s76 = sphi 0, %s62
      %s80 = sphi 0, %s80
      %s82 = sphi 0, %s80
      %s83 = sphi 0, %s82
      %s97 = sphi 0, %s83
      %s101 = sphi 0, %s101
      %s103 = sphi 0, %s101
      %s104 = sphi 0, %s103
      %s118 = sphi 0, %s104
      %s126 = sphi 0, %s128
      %s129 = sphi 0, %s126
      %s130 = sphi 0, %s129
      %s146 = sphi 0, %s130
    $region4: #{tpu_custom_call.1} parent=1 // loop_header_branch
      %16 = sbr.rel (%p14) target = $region8
    $region5: #{tpu_custom_call.1} parent=1 // loop_body
      %s18 = ssub.s32 %s13, 1
      %s19 = ssub.s32 %s13, 2
      %s26 = sadd.s32 1, %s21
      %p27 = scmp.ge.s32.totalorder %s26, 1
      %s28 = scalar_select %p27, 0, %s26
      %s29 = sadd.s32 1, %s20
      %s30 = scalar_select %p27, %s29, %s20
      %p31 = scmp.ge.s32.totalorder %s30, 2
      %s32 = scalar_select %p31, 0, %s30
      %s33 = ssub.s32 %s20, %s32
      %p34 = scmp.eq.s32.totalorder %s33, 0
      %s36 = sadd.s32 %s35, 1
      %s37 = scalar_select %p34, %s35, %s36
      %p40 = pneg %p34
      %p41 = scmp.eq.s32.totalorder %s13, 1
      %p42 = por %p40, %p41
      %p43 = scmp.ne.s32.totalorder %s35, %s38
      %p44 = scmp.eq.s32.totalorder %s13, 0
      %p45 = por %p43, %p44
      %p46 = scmp.ne.s32.totalorder %s35, %s38
      %p47 = scmp.eq.s32.totalorder %s18, 1
      %p48 = por %p46, %p47
      %p49 = scmp.ne.s32.totalorder %s38, %s39
      %p50 = scmp.eq.s32.totalorder %s18, 0
      %p51 = por %p49, %p50
      %p52 = scmp.ne.s32.totalorder %s38, %s39
      %p53 = scmp.eq.s32.totalorder %s19, 1
      %p54 = por %p52, %p53
      %p56 = scmp.ne.s32.totalorder %s39, %s55
      %p57 = scmp.eq.s32.totalorder %s19, 0
      %p58 = por %p56, %p57
      %s60 = sadd.s32 %s59, 1
      %p63 = scmp.eq.s32.totalorder %s13, 1
      %p64 = scmp.ne.s32.totalorder %s59, %s61
      %p65 = scmp.eq.s32.totalorder %s13, 0
      %p66 = por %p64, %p65
      %p67 = scmp.ne.s32.totalorder %s59, %s61
      %p68 = scmp.eq.s32.totalorder %s18, 1
      %p69 = por %p67, %p68
      %p70 = scmp.ne.s32.totalorder %s61, %s62
      %p71 = scmp.eq.s32.totalorder %s18, 0
      %p72 = por %p70, %p71
      %p73 = scmp.ne.s32.totalorder %s61, %s62
      %p74 = scmp.eq.s32.totalorder %s19, 1
      %p75 = por %p73, %p74
      %p77 = scmp.ne.s32.totalorder %s62, %s76
      %p78 = scmp.eq.s32.totalorder %s19, 0
      %p79 = por %p77, %p78
      %s81 = sadd.s32 %s80, 1
      %p84 = scmp.eq.s32.totalorder %s13, 1
      %p85 = scmp.ne.s32.totalorder %s80, %s82
      %p86 = scmp.eq.s32.totalorder %s13, 0
      %p87 = por %p85, %p86
      %p88 = scmp.ne.s32.totalorder %s80, %s82
      %p89 = scmp.eq.s32.totalorder %s18, 1
      %p90 = por %p88, %p89
      %p91 = scmp.ne.s32.totalorder %s82, %s83
      %p92 = scmp.eq.s32.totalorder %s18, 0
      %p93 = por %p91, %p92
      %p94 = scmp.ne.s32.totalorder %s82, %s83
      %p95 = scmp.eq.s32.totalorder %s19, 1
      %p96 = por %p94, %p95
      %p98 = scmp.ne.s32.totalorder %s83, %s97
      %p99 = scmp.eq.s32.totalorder %s19, 0
      %p100 = por %p98, %p99
      %s102 = sadd.s32 %s101, 1
      %p105 = scmp.eq.s32.totalorder %s13, 1
      %p106 = scmp.ne.s32.totalorder %s101, %s103
      %p107 = scmp.eq.s32.totalorder %s13, 0
      %p108 = por %p106, %p107
      %p109 = scmp.ne.s32.totalorder %s101, %s103
      %p110 = scmp.eq.s32.totalorder %s18, 1
      %p111 = por %p109, %p110
      %p112 = scmp.ne.s32.totalorder %s103, %s104
      %p113 = scmp.eq.s32.totalorder %s18, 0
      %p114 = por %p112, %p113
      %p115 = scmp.ne.s32.totalorder %s103, %s104
      %p116 = scmp.eq.s32.totalorder %s19, 1
      %p117 = por %p115, %p116
      %p119 = scmp.ne.s32.totalorder %s104, %s118
      %p120 = scmp.eq.s32.totalorder %s19, 0
      %p121 = por %p119, %p120
      %s122 = ssub.s32 %s20, %s32
      %s123 = ssub.s32 %s21, %s28
      %s124 = sor.u32 %s122, %s123
      %p125 = scmp.eq.s32.totalorder %s124, 0
      %s127 = sadd.s32 %s126, 1
      %s128 = scalar_select %p125, %s126, %s127
      %p131 = pneg %p125
      %p132 = scmp.eq.s32.totalorder %s13, 1
      %p133 = por %p131, %p132
      %p134 = scmp.ne.s32.totalorder %s126, %s129
      %p135 = scmp.eq.s32.totalorder %s13, 0
      %p136 = por %p134, %p135
      %p137 = scmp.ne.s32.totalorder %s126, %s129
      %p138 = scmp.eq.s32.totalorder %s18, 1
      %p139 = por %p137, %p138
      %p140 = scmp.ne.s32.totalorder %s129, %s130
      %p141 = scmp.eq.s32.totalorder %s18, 0
      %p142 = por %p140, %p141
      %p143 = scmp.ne.s32.totalorder %s129, %s130
      %p144 = scmp.eq.s32.totalorder %s19, 1
      %p145 = por %p143, %p144
      %p147 = scmp.ne.s32.totalorder %s130, %s146
      %p148 = scmp.eq.s32.totalorder %s19, 0
      %p149 = por %p147, %p148
      %p150 = scmp.le.s32.totalorder 1, %s13
      %p151 = scmp.lt.s32.totalorder %s13, 3
      %p152 = pnand %p150, %p151
      %p153 = pneg %p152
      // Predicated region
      $region9: #{tpu_custom_call.1} parent=5 // pred_check
        _
      $region10: #{tpu_custom_call.1} parent=5 // pred_check_branch
        %155 = sbr.rel (%p152) target = $region12
      $region11: #{tpu_custom_call.1} parent=5 // pred_region
        %s156 = ssub.s32 %s13, 1
        // Predicated region
        $region13: #{tpu_custom_call.1} parent=11 // pred_check
          %p157 = pneg %p72
        $region14: #{tpu_custom_call.1} parent=11 // pred_check_branch
          %159 = sbr.rel (%p157) target = $region16
        $region15: #{tpu_custom_call.1} parent=11 // pred_region
          _
        $region16: #{tpu_custom_call.1} parent=11 // pred_fallthru
          _
        // Predicated region
        $region17: #{tpu_custom_call.1} parent=11 // pred_check
          %p160 = pneg %p93
        $region18: #{tpu_custom_call.1} parent=11 // pred_check_branch
          %162 = sbr.rel (%p160) target = $region20
        $region19: #{tpu_custom_call.1} parent=11 // pred_region
          _
        $region20: #{tpu_custom_call.1} parent=11 // pred_fallthru
          _
        // Predicated region
        $region21: #{tpu_custom_call.1} parent=11 // pred_check
          %p163 = pneg %p114
        $region22: #{tpu_custom_call.1} parent=11 // pred_check_branch
          %165 = sbr.rel (%p163) target = $region24
        $region23: #{tpu_custom_call.1} parent=11 // pred_region
          _
        $region24: #{tpu_custom_call.1} parent=11 // pred_fallthru
          _
      $region12: #{tpu_custom_call.1} parent=5 // pred_fallthru
        _
      %p166 = scmp.lt.s32.totalorder %s13, 2
      // Predicated region
      $region25: #{tpu_custom_call.1} parent=5 // pred_check
        %p167 = pneg %p166
      $region26: #{tpu_custom_call.1} parent=5 // pred_check_branch
        %169 = sbr.rel (%p167) target = $region28
      $region27: #{tpu_custom_call.1} parent=5 // pred_region
        // Predicated region
        $region29: #{tpu_custom_call.1} parent=27 // pred_check
          %p170 = pneg %p45
        $region30: #{tpu_custom_call.1} parent=27 // pred_check_branch
          %172 = sbr.rel (%p170) target = $region32
        $region31: #{tpu_custom_call.1} parent=27 // pred_region
          %p173 = scmp.lt.s32.totalorder %s20, 1
          %s174 = scalar_select %p173, %s20, 1
          %s175 = smul.addr %s174, 20
          %s176 = smul.addr %s175, 4
          %s177 = scalar_lea.vmem %s0, %s176
        $region32: #{tpu_custom_call.1} parent=27 // pred_fallthru
          _
      $region28: #{tpu_custom_call.1} parent=5 // pred_fallthru
        _
      %p178 = scmp.le.s32.totalorder 1, %s13
      %p179 = scmp.lt.s32.totalorder %s13, 3
      %p180 = pnand %p178, %p179
      %p181 = pneg %p180
      // Predicated region
      $region33: #{tpu_custom_call.1} parent=5 // pred_check
        _
      $region34: #{tpu_custom_call.1} parent=5 // pred_check_branch
        %183 = sbr.rel (%p180) target = $region36
      $region35: #{tpu_custom_call.1} parent=5 // pred_region
        %s184 = ssub.s32 %s13, 1
        %p185 = scmp.lt.s32.totalorder %s22, 1
        %s186 = scalar_select %p185, %s22, 1
        %s187 = smul.addr %s186, 20
        %s188 = smul.addr %s187, 4
        %s189 = scalar_lea.vmem %s0, %s188
        %p190 = pneg %p51
        %p191 = pneg %p48
        %p192 = pneg %p72
        %p193 = pneg %p69
        %p194 = pneg %p93
        %p195 = pneg %p90
        %p196 = pneg %p114
        %p197 = pneg %p111
        %p198 = pneg %p142
        %p199 = pneg %p139
        %s200 = sand.u32 %s129, 1
        %s201 = scalar_lea.sflag [#allocation5], %s200
        %s202 = sand.u32 %s129, 1
        %s203 = smul.addr %s202, 16
        %s204 = scalar_lea.vmem [#allocation4], %s203
        %p205 = scmp.lt.s32.totalorder %s22, 1
        %s206 = scalar_select %p205, %s22, 1
        %s207 = smul.addr %s206, 20
        %s208 = smul.addr %s207, 4
        %s209 = scalar_lea.vmem %s0, %s208
        %s210 = smul.u32 8, %s23
        %s212 = smul.u32 %s23, 8
        %s213 = smul.u32 %s212, 2
        %s214 = smul.addr %s213, 4
        %s215 = scalar_lea.vmem %s209, %s214
        %v216 = vld [vmem:[%s215] sm:$0xf]
        %v217 = vld [vmem:[%s215 + $0x8] sm:$0xf]
        %v218 = vld [vmem:[%s215 + $0x10] sm:$0xf]
        %v219 = vld [vmem:[%s215 + $0x18] sm:$0xf]
        %v220 = vld [vmem:[%s215 + $0x20] sm:$0xf]
        %v221 = vld [vmem:[%s215 + $0x28] sm:$0xf]
        %v222 = vld [vmem:[%s215 + $0x30] sm:$0xf]
        %v223 = vld [vmem:[%s215 + $0x38] sm:$0xf]
        %v232 = vunpack.c.l.b16 %v216
        %v233 = vunpack.c.l.b16 %v217
        %v234 = vunpack.c.l.b16 %v218
        %v235 = vunpack.c.l.b16 %v219
        %v236 = vunpack.c.l.b16 %v220
        %v237 = vunpack.c.l.b16 %v221
        %v238 = vunpack.c.l.b16 %v222
        %v239 = vunpack.c.l.b16 %v223
        %v240 = vpack.c.b16 %v233, %v232
        %v241 = vpack.c.b16 %v235, %v234
        %v242 = vpack.c.b16 %v237, %v236
        %v243 = vpack.c.b16 %v239, %v238
        %vm248 = vcmask 31744
        %249 = vst.msk [vmem:[#allocation2] sm:$0xff] %vm248, %v240
        %250 = vst.msk [vmem:[#allocation2 + $0x8] sm:$0xff] %vm248, %v241
        %251 = vst.msk [vmem:[#allocation2 + $0x10] sm:$0xff] %vm248, %v242
        %252 = vst.msk [vmem:[#allocation2 + $0x18] sm:$0xff] %vm248, %v243
        %v253 = vld [vmem:[%s215] sm:$0xf]
        %v254 = vld [vmem:[%s215 + $0x4] sm:$0x1]
        %v255 = vld [vmem:[%s215 + $0x8] sm:$0xf]
        %v256 = vld [vmem:[%s215 + $0xc] sm:$0x1]
        %v257 = vld [vmem:[%s215 + $0x10] sm:$0xf]
        %v258 = vld [vmem:[%s215 + $0x14] sm:$0x1]
        %v259 = vld [vmem:[%s215 + $0x18] sm:$0xf]
        %v260 = vld [vmem:[%s215 + $0x1c] sm:$0x1]
        %v261 = vld [vmem:[%s215 + $0x20] sm:$0xf]
        %v262 = vld [vmem:[%s215 + $0x24] sm:$0x1]
        %v263 = vld [vmem:[%s215 + $0x28] sm:$0xf]
        %v264 = vld [vmem:[%s215 + $0x2c] sm:$0x1]
        %v265 = vld [vmem:[%s215 + $0x30] sm:$0xf]
        %v266 = vld [vmem:[%s215 + $0x34] sm:$0x1]
        %v267 = vld [vmem:[%s215 + $0x38] sm:$0xf]
        %v268 = vld [vmem:[%s215 + $0x3c] sm:$0x1]
        %vm269 = vsmask.f32 3328
        %vm270 = vsmask.f32 7440
        %vm271 = vmor %vm269, %vm270
        %v273 = vshrl.u32 %v253, 16
        %v275 = vrot.slane %v273, 4
        %v276 = vshll.u32 %v253, 16
        %v278 = vrot.slane %v276, 5
        %v279 = vor.u32 %v275, %v278
        %v280 = vrot.slane %v279, 4
        %v282 = vshll.u32 %v254, 16
        %v284 = vrot.slane %v282, 5
        %v285 = vsel %vm271, %v280, %v284
        %v287 = vshrl.u32 %v255, 16
        %v289 = vrot.slane %v287, 4
        %v290 = vshll.u32 %v255, 16
        %v292 = vrot.slane %v290, 5
        %v293 = vor.u32 %v289, %v292
        %v294 = vrot.slane %v293, 4
        %v296 = vshll.u32 %v256, 16
        %v298 = vrot.slane %v296, 5
        %v299 = vsel %vm271, %v294, %v298
        %v301 = vshrl.u32 %v257, 16
        %v303 = vrot.slane %v301, 4
        %v304 = vshll.u32 %v257, 16
        %v306 = vrot.slane %v304, 5
        %v307 = vor.u32 %v303, %v306
        %v308 = vrot.slane %v307, 4
        %v310 = vshll.u32 %v258, 16
        %v312 = vrot.slane %v310, 5
        %v313 = vsel %vm271, %v308, %v312
        %v315 = vshrl.u32 %v259, 16
        %v317 = vrot.slane %v315, 4
        %v318 = vshll.u32 %v259, 16
        %v320 = vrot.slane %v318, 5
        %v321 = vor.u32 %v317, %v320
        %v322 = vrot.slane %v321, 4
        %v324 = vshll.u32 %v260, 16
        %v326 = vrot.slane %v324, 5
        %v327 = vsel %vm271, %v322, %v326
        %v329 = vshrl.u32 %v261, 16
        %v331 = vrot.slane %v329, 4
        %v332 = vshll.u32 %v261, 16
        %v334 = vrot.slane %v332, 5
        %v335 = vor.u32 %v331, %v334
        %v336 = vrot.slane %v335, 4
        %v338 = vshll.u32 %v262, 16
        %v340 = vrot.slane %v338, 5
        %v341 = vsel %vm271, %v336, %v340
        %v343 = vshrl.u32 %v263, 16
        %v345 = vrot.slane %v343, 4
        %v346 = vshll.u32 %v263, 16
        %v348 = vrot.slane %v346, 5
        %v349 = vor.u32 %v345, %v348
        %v350 = vrot.slane %v349, 4
        %v352 = vshll.u32 %v264, 16
        %v354 = vrot.slane %v352, 5
        %v355 = vsel %vm271, %v350, %v354
        %v357 = vshrl.u32 %v265, 16
        %v359 = vrot.slane %v357, 4
        %v360 = vshll.u32 %v265, 16
        %v362 = vrot.slane %v360, 5
        %v363 = vor.u32 %v359, %v362
        %v364 = vrot.slane %v363, 4
        %v366 = vshll.u32 %v266, 16
        %v368 = vrot.slane %v366, 5
        %v369 = vsel %vm271, %v364, %v368
        %v371 = vshrl.u32 %v267, 16
        %v373 = vrot.slane %v371, 4
        %v374 = vshll.u32 %v267, 16
        %v376 = vrot.slane %v374, 5
        %v377 = vor.u32 %v373, %v376
        %v378 = vrot.slane %v377, 4
        %v380 = vshll.u32 %v268, 16
        %v382 = vrot.slane %v380, 5
        %v383 = vsel %vm271, %v378, %v382
        %v384 = vunpack.c.l.b16 %v285
        %v385 = vunpack.c.l.b16 %v299
        %v386 = vunpack.c.l.b16 %v313
        %v387 = vunpack.c.l.b16 %v327
        %v388 = vunpack.c.l.b16 %v341
        %v389 = vunpack.c.l.b16 %v355
        %v390 = vunpack.c.l.b16 %v369
        %v391 = vunpack.c.l.b16 %v383
        %v392 = vpack.c.b16 %v385, %v384
        %v393 = vpack.c.b16 %v387, %v386
        %v394 = vpack.c.b16 %v389, %v388
        %v395 = vpack.c.b16 %v391, %v390
        %396 = vrot.lane.b32.xlu0 %v392, 4
        %v397 = vpop.permute.xlu0 %396
        %398 = vrot.lane.b32.xlu0 %v393, 4
        %v399 = vpop.permute.xlu0 %398
        %400 = vrot.lane.b32.xlu0 %v394, 4
        %v401 = vpop.permute.xlu0 %400
        %402 = vrot.lane.b32.xlu0 %v395, 4
        %v403 = vpop.permute.xlu0 %402
        %vm408 = vcmask 64544
        %409 = vst.msk [vmem:[#allocation2] sm:$0xff] %vm408, %v397
        %410 = vst.msk [vmem:[#allocation2 + $0x8] sm:$0xff] %vm408, %v399
        %411 = vst.msk [vmem:[#allocation2 + $0x10] sm:$0xff] %vm408, %v401
        %412 = vst.msk [vmem:[#allocation2 + $0x18] sm:$0xff] %vm408, %v403
        %v413 = vld [vmem:[%s215] sm:$0xe]
        %v414 = vld [vmem:[%s215 + $0x4] sm:$0x1]
        %v415 = vld [vmem:[%s215 + $0x8] sm:$0xe]
        %v416 = vld [vmem:[%s215 + $0xc] sm:$0x1]
        %v417 = vld [vmem:[%s215 + $0x10] sm:$0xe]
        %v418 = vld [vmem:[%s215 + $0x14] sm:$0x1]
        %v419 = vld [vmem:[%s215 + $0x18] sm:$0xe]
        %v420 = vld [vmem:[%s215 + $0x1c] sm:$0x1]
        %v421 = vld [vmem:[%s215 + $0x20] sm:$0xe]
        %v422 = vld [vmem:[%s215 + $0x24] sm:$0x1]
        %v423 = vld [vmem:[%s215 + $0x28] sm:$0xe]
        %v424 = vld [vmem:[%s215 + $0x2c] sm:$0x1]
        %v425 = vld [vmem:[%s215 + $0x30] sm:$0xe]
        %v426 = vld [vmem:[%s215 + $0x34] sm:$0x1]
        %v427 = vld [vmem:[%s215 + $0x38] sm:$0xe]
        %v428 = vld [vmem:[%s215 + $0x3c] sm:$0x1]
        %vm445 = vcmask 1042432
        %vm446 = vcmask 1046532
        %vm447 = vmor %vm445, %vm446
        %v448 = vrot.slane %v413, 5
        %v449 = vrot.slane %v448, 4
        %v450 = vrot.slane %v414, 5
        %v451 = vsel %vm447, %v449, %v450
        %v452 = vrot.slane %v415, 5
        %v453 = vrot.slane %v452, 4
        %v454 = vrot.slane %v416, 5
        %v455 = vsel %vm447, %v453, %v454
        %v456 = vrot.slane %v417, 5
        %v457 = vrot.slane %v456, 4
        %v458 = vrot.slane %v418, 5
        %v459 = vsel %vm447, %v457, %v458
        %v460 = vrot.slane %v419, 5
        %v461 = vrot.slane %v460, 4
        %v462 = vrot.slane %v420, 5
        %v463 = vsel %vm447, %v461, %v462
        %v464 = vrot.slane %v421, 5
        %v465 = vrot.slane %v464, 4
        %v466 = vrot.slane %v422, 5
        %v467 = vsel %vm447, %v465, %v466
        %v468 = vrot.slane %v423, 5
        %v469 = vrot.slane %v468, 4
        %v470 = vrot.slane %v424, 5
        %v471 = vsel %vm447, %v469, %v470
        %v472 = vrot.slane %v425, 5
        %v473 = vrot.slane %v472, 4
        %v474 = vrot.slane %v426, 5
        %v475 = vsel %vm447, %v473, %v474
        %v476 = vrot.slane %v427, 5
        %v477 = vrot.slane %v476, 4
        %v478 = vrot.slane %v428, 5
        %v479 = vsel %vm447, %v477, %v478
        %v480 = vunpack.c.l.b16 %v451
        %v481 = vunpack.c.l.b16 %v455
        %v482 = vunpack.c.l.b16 %v459
        %v483 = vunpack.c.l.b16 %v463
        %v484 = vunpack.c.l.b16 %v467
        %v485 = vunpack.c.l.b16 %v471
        %v486 = vunpack.c.l.b16 %v475
        %v487 = vunpack.c.l.b16 %v479
        %v488 = vpack.c.b16 %v481, %v480
        %v489 = vpack.c.b16 %v483, %v482
        %v490 = vpack.c.b16 %v485, %v484
        %v491 = vpack.c.b16 %v487, %v486
        %492 = vrot.lane.b32.xlu0 %v488, 8
        %v493 = vpop.permute.xlu0 %492
        %494 = vrot.lane.b32.xlu0 %v489, 8
        %v495 = vpop.permute.xlu0 %494
        %496 = vrot.lane.b32.xlu0 %v490, 8
        %v497 = vpop.permute.xlu0 %496
        %498 = vrot.lane.b32.xlu0 %v491, 8
        %v499 = vpop.permute.xlu0 %498
        %vm504 = vcmask 97344
        %505 = vst.msk [vmem:[#allocation2] sm:$0xff] %vm504, %v493
        %506 = vst.msk [vmem:[#allocation2 + $0x8] sm:$0xff] %vm504, %v495
        %507 = vst.msk [vmem:[#allocation2 + $0x10] sm:$0xff] %vm504, %v497
        %508 = vst.msk [vmem:[#allocation2 + $0x18] sm:$0xff] %vm504, %v499
        %s509 = sadd.s32 %s212, 1
        %s510 = smul.u32 %s509, 2
        %s511 = smul.addr %s510, 4
        %s512 = scalar_lea.vmem %s209, %s511
        %v513 = vld [vmem:[%s512] sm:$0xf]
        %v514 = vld [vmem:[%s512 + $0x8] sm:$0xf]
        %v515 = vld [vmem:[%s512 + $0x10] sm:$0xf]
        %v516 = vld [vmem:[%s512 + $0x18] sm:$0xf]
        %v517 = vld [vmem:[%s512 + $0x20] sm:$0xf]
        %v518 = vld [vmem:[%s512 + $0x28] sm:$0xf]
        %v519 = vld [vmem:[%s512 + $0x30] sm:$0xf]
        %v520 = vld [vmem:[%s512 + $0x38] sm:$0xf]
        %v529 = vunpack.c.l.b16 %v513
        %v530 = vunpack.c.l.b16 %v514
        %v531 = vunpack.c.l.b16 %v515
        %v532 = vunpack.c.l.b16 %v516
        %v533 = vunpack.c.l.b16 %v517
        %v534 = vunpack.c.l.b16 %v518
        %v535 = vunpack.c.l.b16 %v519
        %v536 = vunpack.c.l.b16 %v520
        %v537 = vpack.c.b16 %v530, %v529
        %v538 = vpack.c.b16 %v532, %v531
        %v539 = vpack.c.b16 %v534, %v533
        %v540 = vpack.c.b16 %v536, %v535
        %541 = vrot.lane.b32.xlu0 %v537, 12
        %v542 = vpop.permute.xlu0 %541
        %543 = vrot.lane.b32.xlu0 %v538, 12
        %v544 = vpop.permute.xlu0 %543
        %545 = vrot.lane.b32.xlu0 %v539, 12
        %v546 = vpop.permute.xlu0 %545
        %547 = vrot.lane.b32.xlu0 %v540, 12
        %v548 = vpop.permute.xlu0 %547
        %vm553 = vcmask 130144
        %554 = vst.msk [vmem:[#allocation2] sm:$0xff] %vm553, %v542
        %555 = vst.msk [vmem:[#allocation2 + $0x8] sm:$0xff] %vm553, %v544
        %556 = vst.msk [vmem:[#allocation2 + $0x10] sm:$0xff] %vm553, %v546
        %557 = vst.msk [vmem:[#allocation2 + $0x18] sm:$0xff] %vm553, %v548
        %v558 = vld [vmem:[%s512] sm:$0xf]
        %v559 = vld [vmem:[%s512 + $0x4] sm:$0x1]
        %v560 = vld [vmem:[%s512 + $0x8] sm:$0xf]
        %v561 = vld [vmem:[%s512 + $0xc] sm:$0x1]
        %v562 = vld [vmem:[%s512 + $0x10] sm:$0xf]
        %v563 = vld [vmem:[%s512 + $0x14] sm:$0x1]
        %v564 = vld [vmem:[%s512 + $0x18] sm:$0xf]
        %v565 = vld [vmem:[%s512 + $0x1c] sm:$0x1]
        %v566 = vld [vmem:[%s512 + $0x20] sm:$0xf]
        %v567 = vld [vmem:[%s512 + $0x24] sm:$0x1]
        %v568 = vld [vmem:[%s512 + $0x28] sm:$0xf]
        %v569 = vld [vmem:[%s512 + $0x2c] sm:$0x1]
        %v570 = vld [vmem:[%s512 + $0x30] sm:$0xf]
        %v571 = vld [vmem:[%s512 + $0x34] sm:$0x1]
        %v572 = vld [vmem:[%s512 + $0x38] sm:$0xf]
        %v573 = vld [vmem:[%s512 + $0x3c] sm:$0x1]
        %v575 = vshrl.u32 %v558, 16
        %v577 = vrot.slane %v575, 4
        %v578 = vshll.u32 %v558, 16
        %v580 = vrot.slane %v578, 5
        %v581 = vor.u32 %v577, %v580
        %v582 = vrot.slane %v581, 4
        %v584 = vshll.u32 %v559, 16
        %v586 = vrot.slane %v584, 5
        %v587 = vsel %vm271, %v582, %v586
        %v589 = vshrl.u32 %v560, 16
        %v591 = vrot.slane %v589, 4
        %v592 = vshll.u32 %v560, 16
        %v594 = vrot.slane %v592, 5
        %v595 = vor.u32 %v591, %v594
        %v596 = vrot.slane %v595, 4
        %v598 = vshll.u32 %v561, 16
        %v600 = vrot.slane %v598, 5
        %v601 = vsel %vm271, %v596, %v600
        %v603 = vshrl.u32 %v562, 16
        %v605 = vrot.slane %v603, 4
        %v606 = vshll.u32 %v562, 16
        %v608 = vrot.slane %v606, 5
        %v609 = vor.u32 %v605, %v608
        %v610 = vrot.slane %v609, 4
        %v612 = vshll.u32 %v563, 16
        %v614 = vrot.slane %v612, 5
        %v615 = vsel %vm271, %v610, %v614
        %v617 = vshrl.u32 %v564, 16
        %v619 = vrot.slane %v617, 4
        %v620 = vshll.u32 %v564, 16
        %v622 = vrot.slane %v620, 5
        %v623 = vor.u32 %v619, %v622
        %v624 = vrot.slane %v623, 4
        %v626 = vshll.u32 %v565, 16
        %v628 = vrot.slane %v626, 5
        %v629 = vsel %vm271, %v624, %v628
        %v631 = vshrl.u32 %v566, 16
        %v633 = vrot.slane %v631, 4
        %v634 = vshll.u32 %v566, 16
        %v636 = vrot.slane %v634, 5
        %v637 = vor.u32 %v633, %v636
        %v638 = vrot.slane %v637, 4
        %v640 = vshll.u32 %v567, 16
        %v642 = vrot.slane %v640, 5
        %v643 = vsel %vm271, %v638, %v642
        %v645 = vshrl.u32 %v568, 16
        %v647 = vrot.slane %v645, 4
        %v648 = vshll.u32 %v568, 16
        %v650 = vrot.slane %v648, 5
        %v651 = vor.u32 %v647, %v650
        %v652 = vrot.slane %v651, 4
        %v654 = vshll.u32 %v569, 16
        %v656 = vrot.slane %v654, 5
        %v657 = vsel %vm271, %v652, %v656
        %v659 = vshrl.u32 %v570, 16
        %v661 = vrot.slane %v659, 4
        %v662 = vshll.u32 %v570, 16
        %v664 = vrot.slane %v662, 5
        %v665 = vor.u32 %v661, %v664
        %v666 = vrot.slane %v665, 4
        %v668 = vshll.u32 %v571, 16
        %v670 = vrot.slane %v668, 5
        %v671 = vsel %vm271, %v666, %v670
        %v673 = vshrl.u32 %v572, 16
        %v675 = vrot.slane %v673, 4
        %v676 = vshll.u32 %v572, 16
        %v678 = vrot.slane %v676, 5
        %v679 = vor.u32 %v675, %v678
        %v680 = vrot.slane %v679, 4
        %v682 = vshll.u32 %v573, 16
        %v684 = vrot.slane %v682, 5
        %v685 = vsel %vm271, %v680, %v684
        %v686 = vunpack.c.l.b16 %v587
        %v687 = vunpack.c.l.b16 %v601
        %v688 = vunpack.c.l.b16 %v615
        %v689 = vunpack.c.l.b16 %v629
        %v690 = vunpack.c.l.b16 %v643
        %v691 = vunpack.c.l.b16 %v657
        %v692 = vunpack.c.l.b16 %v671
        %v693 = vunpack.c.l.b16 %v685
        %v694 = vpack.c.b16 %v687, %v686
        %v695 = vpack.c.b16 %v689, %v688
        %v696 = vpack.c.b16 %v691, %v690
        %v697 = vpack.c.b16 %v693, %v692
        %698 = vrot.lane.b32.xlu0 %v694, 16
        %v699 = vpop.permute.xlu0 %698
        %700 = vrot.lane.b32.xlu0 %v695, 16
        %v701 = vpop.permute.xlu0 %700
        %702 = vrot.lane.b32.xlu0 %v696, 16
        %v703 = vpop.permute.xlu0 %702
        %704 = vrot.lane.b32.xlu0 %v697, 16
        %v705 = vpop.permute.xlu0 %704
        %vm710 = vcmask 162944
        %711 = vst.msk [vmem:[#allocation2] sm:$0xff] %vm710, %v699
        %712 = vst.msk [vmem:[#allocation2 + $0x8] sm:$0xff] %vm710, %v701
        %713 = vst.msk [vmem:[#allocation2 + $0x10] sm:$0xff] %vm710, %v703
        %714 = vst.msk [vmem:[#allocation2 + $0x18] sm:$0xff] %vm710, %v705
        %v715 = vld [vmem:[%s512] sm:$0xe]
        %v716 = vld [vmem:[%s512 + $0x4] sm:$0x1]
        %v717 = vld [vmem:[%s512 + $0x8] sm:$0xe]
        %v718 = vld [vmem:[%s512 + $0xc] sm:$0x1]
        %v719 = vld [vmem:[%s512 + $0x10] sm:$0xe]
        %v720 = vld [vmem:[%s512 + $0x14] sm:$0x1]
        %v721 = vld [vmem:[%s512 + $0x18] sm:$0xe]
        %v722 = vld [vmem:[%s512 + $0x1c] sm:$0x1]
        %v723 = vld [vmem:[%s512 + $0x20] sm:$0xe]
        %v724 = vld [vmem:[%s512 + $0x24] sm:$0x1]
        %v725 = vld [vmem:[%s512 + $0x28] sm:$0xe]
        %v726 = vld [vmem:[%s512 + $0x2c] sm:$0x1]
        %v727 = vld [vmem:[%s512 + $0x30] sm:$0xe]
        %v728 = vld [vmem:[%s512 + $0x34] sm:$0x1]
        %v729 = vld [vmem:[%s512 + $0x38] sm:$0xe]
        %v730 = vld [vmem:[%s512 + $0x3c] sm:$0x1]
        %v747 = vrot.slane %v715, 5
        %v748 = vrot.slane %v747, 4
        %v749 = vrot.slane %v716, 5
        %v750 = vsel %vm447, %v748, %v749
        %v751 = vrot.slane %v717, 5
        %v752 = vrot.slane %v751, 4
        %v753 = vrot.slane %v718, 5
        %v754 = vsel %vm447, %v752, %v753
        %v755 = vrot.slane %v719, 5
        %v756 = vrot.slane %v755, 4
        %v757 = vrot.slane %v720, 5
        %v758 = vsel %vm447, %v756, %v757
        %v759 = vrot.slane %v721, 5
        %v760 = vrot.slane %v759, 4
        %v761 = vrot.slane %v722, 5
        %v762 = vsel %vm447, %v760, %v761
        %v763 = vrot.slane %v723, 5
        %v764 = vrot.slane %v763, 4
        %v765 = vrot.slane %v724, 5
        %v766 = vsel %vm447, %v764, %v765
        %v767 = vrot.slane %v725, 5
        %v768 = vrot.slane %v767, 4
        %v769 = vrot.slane %v726, 5
        %v770 = vsel %vm447, %v768, %v769
        %v771 = vrot.slane %v727, 5
        %v772 = vrot.slane %v771, 4
        %v773 = vrot.slane %v728, 5
        %v774 = vsel %vm447, %v772, %v773
        %v775 = vrot.slane %v729, 5
        %v776 = vrot.slane %v775, 4
        %v777 = vrot.slane %v730, 5
        %v778 = vsel %vm447, %v776, %v777
        %v779 = vunpack.c.l.b16 %v750
        %v780 = vunpack.c.l.b16 %v754
        %v781 = vunpack.c.l.b16 %v758
        %v782 = vunpack.c.l.b16 %v762
        %v783 = vunpack.c.l.b16 %v766
        %v784 = vunpack.c.l.b16 %v770
        %v785 = vunpack.c.l.b16 %v774
        %v786 = vunpack.c.l.b16 %v778
        %v787 = vpack.c.b16 %v780, %v779
        %v788 = vpack.c.b16 %v782, %v781
        %v789 = vpack.c.b16 %v784, %v783
        %v790 = vpack.c.b16 %v786, %v785
        %791 = vrot.lane.b32.xlu0 %v787, 20
        %v792 = vpop.permute.xlu0 %791
        %793 = vrot.lane.b32.xlu0 %v788, 20
        %v794 = vpop.permute.xlu0 %793
        %795 = vrot.lane.b32.xlu0 %v789, 20
        %v796 = vpop.permute.xlu0 %795
        %797 = vrot.lane.b32.xlu0 %v790, 20
        %v798 = vpop.permute.xlu0 %797
        %vm803 = vcmask 195744
        %804 = vst.msk [vmem:[#allocation2] sm:$0xff] %vm803, %v792
        %805 = vst.msk [vmem:[#allocation2 + $0x8] sm:$0xff] %vm803, %v794
        %806 = vst.msk [vmem:[#allocation2 + $0x10] sm:$0xff] %vm803, %v796
        %807 = vst.msk [vmem:[#allocation2 + $0x18] sm:$0xff] %vm803, %v798
        %v808 = vld [vmem:[#allocation2] sm:$0xff]
        %v809 = vld [vmem:[#allocation2 + $0x8] sm:$0xff]
        %v810 = vld [vmem:[#allocation2 + $0x10] sm:$0xff]
        %v811 = vld [vmem:[#allocation2 + $0x18] sm:$0xff]
        %v812 = vld [vmem:[%s1] sm:$0xf]
        %v813 = vld [vmem:[%s1 + $0x4] sm:$0xf]
        %v814 = vld [vmem:[%s1 + $0x8] sm:$0xf]
        %v815 = vld [vmem:[%s2] sm:$0x1]
        %v817 = vlaneseq
        %v818 = vshrl.u32 %v817, 7
        %v819 = vsub.s32 0, %v818
        %v820 = vrot.slane %v815, %v819
        %v825 = vunpack.c.l.b16 %v812
        %v826 = vunpack.c.l.b16 %v813
        %v827 = vunpack.c.l.b16 %v814
        %v828 = vpack.c.b16 %v826, %v825
        %v829 = vpack.c.b16 %v827, %v827
        %vm831 = vcmask 195584
        %v833 = vsel %vm831, %v808, 0
        %v836 = vsel %vm831, %v809, 0
        %v839 = vsel %vm831, %v810, 0
        %v842 = vsel %vm831, %v811, 0
        %vm844 = vcmask 1043456
        %v846 = vsel %vm844, %v829, 0
        %848 = vmatprep.subr.bf16.mxu0 0
        %849 = vmatpush1.bf16.msra.mxu0 %v828
        %850 = vmatprep.subr.bf16.mxu0 0
        %851 = vmatpush1.bf16.msra.mxu0 %v846
        %852 = vmatprep.subr.bf16.mxu0 0
        %853 = vmatpush1.bf16.msra.mxu0 0
        %854 = vmatprep.subr.bf16.mxu0 0
        %855 = vmatpush1.bf16.msra.mxu0 0
        %856 = vmatprep.subr.bf16.mxu0 0
        %857 = vmatpush1.bf16.msra.mxu0 0
        %858 = vmatprep.subr.bf16.mxu0 0
        %859 = vmatpush1.bf16.msra.mxu0 0
        %860 = vmatprep.subr.bf16.mxu0 0
        %861 = vmatpush1.bf16.msra.mxu0 0
        %862 = vmatprep.subr.bf16.mxu0 0
        %863 = vmatpush1.bf16.msra.mxu0 0
        %864 = vmatprep.subr.bf16.mxu0 0
        %865 = vmatpush1.bf16.msra.mxu0 0
        %866 = vmatprep.subr.bf16.mxu0 0
        %867 = vmatpush1.bf16.msra.mxu0 0
        %868 = vmatprep.subr.bf16.mxu0 0
        %869 = vmatpush1.bf16.msra.mxu0 0
        %870 = vmatprep.subr.bf16.mxu0 0
        %871 = vmatpush1.bf16.msra.mxu0 0
        %872 = vmatprep.subr.bf16.mxu0 0
        %873 = vmatpush1.bf16.msra.mxu0 0
        %874 = vmatprep.subr.bf16.mxu0 0
        %875 = vmatpush1.bf16.msra.mxu0 0
        %876 = vmatprep.subr.bf16.mxu0 0
        %877 = vmatpush1.bf16.msra.mxu0 0
        %878 = vmatprep.subr.bf16.mxu0 0
        %879 = vmatpush1.bf16.msra.mxu0 0
        %880 = vmatprep.mubr.bf16.mxu0 0
        %881 = vmatmul.mubr.bf16.gmra.mrb[0].mxu0 %v833
        %v882 = vpop.f32.mrb[0].mxu0
        %v883 = vadd.f32 %v820, %v882
        %v884 = vpop.f32.mrb[0].mxu0
        %v885 = vpop.f32.mrb[0].mxu0
        %v886 = vadd.f32 %v820, %v885
        %v887 = vpop.f32.mrb[0].mxu0
        %888 = vmatprep.mubr.bf16.mxu0 0
        %889 = vmatmul.mubr.bf16.gmra.mrb[0].mxu0 %v836
        %v890 = vpop.f32.mrb[0].mxu0
        %v891 = vadd.f32 %v820, %v890
        %v892 = vpop.f32.mrb[0].mxu0
        %v893 = vpop.f32.mrb[0].mxu0
        %v894 = vadd.f32 %v820, %v893
        %v895 = vpop.f32.mrb[0].mxu0
        %896 = vmatprep.mubr.bf16.mxu0 0
        %897 = vmatmul.mubr.bf16.gmra.mrb[0].mxu0 %v839
        %v898 = vpop.f32.mrb[0].mxu0
        %v899 = vadd.f32 %v820, %v898
        %v900 = vpop.f32.mrb[0].mxu0
        %v901 = vpop.f32.mrb[0].mxu0
        %v902 = vadd.f32 %v820, %v901
        %v903 = vpop.f32.mrb[0].mxu0
        %904 = vmatprep.mubr.bf16.mxu0 0
        %905 = vmatmul.mubr.bf16.gmra.mrb[0].mxu0 %v842
        %v906 = vpop.f32.mrb[0].mxu0
        %v907 = vadd.f32 %v820, %v906
        %v908 = vpop.f32.mrb[0].mxu0
        %v909 = vpop.f32.mrb[0].mxu0
        %v910 = vadd.f32 %v820, %v909
        %v911 = vpop.f32.mrb[0].mxu0
        %912 = vdwg.mxu0
        %v913 = vmax.f32 %v883, 0.0
        %v914 = vmax.f32 %v886, 0.0
        %v915 = vmax.f32 %v891, 0.0
        %v916 = vmax.f32 %v894, 0.0
        %v917 = vmax.f32 %v899, 0.0
        %v918 = vmax.f32 %v902, 0.0
        %v919 = vmax.f32 %v907, 0.0
        %v920 = vmax.f32 %v910, 0.0
        %v921 = vpack.c.bf16 %v914, %v913
        %v922 = vpack.c.bf16 %v916, %v915
        %v923 = vpack.c.bf16 %v918, %v917
        %v924 = vpack.c.bf16 %v920, %v919
        %v929 = vunpack.c.l.b16 %v921
        %v930 = vunpack.c.h.b16 %v921
        %v931 = vunpack.c.l.b16 %v922
        %v932 = vunpack.c.h.b16 %v922
        %v933 = vunpack.c.l.b16 %v923
        %v934 = vunpack.c.h.b16 %v923
        %v935 = vunpack.c.l.b16 %v924
        %v936 = vunpack.c.h.b16 %v924
        %v937 = vpack.c.b16 %v929, %v929
        %v938 = vpack.c.b16 %v930, %v930
        %v939 = vpack.c.b16 %v931, %v931
        %v940 = vpack.c.b16 %v932, %v932
        %v941 = vpack.c.b16 %v933, %v933
        %v942 = vpack.c.b16 %v934, %v934
        %v943 = vpack.c.b16 %v935, %v935
        %v944 = vpack.c.b16 %v936, %v936
        %953 = vxpose.xlu0.c.b16.start [1/8] %v937, 128
        %954 = vxpose.xlu0.c.b16.cont [2/8] 0, 128
        %955 = vxpose.xlu0.c.b16.cont [3/8] 0, 128
        %956 = vxpose.xlu0.c.b16.cont [4/8] 0, 128
        %957 = vxpose.xlu0.c.b16.cont [5/8] 0, 128
        %958 = vxpose.xlu0.c.b16.cont [6/8] 0, 128
        %959 = vxpose.xlu0.c.b16.cont [7/8] 0, 128
        %960 = vxpose.xlu0.c.b16.end [8/8] 0, 128
        %v961 = vpop.trf.xlu0
        %v962 = vpop.trf.xlu0
        %v963 = vpop.trf.xlu0
        %v964 = vpop.trf.xlu0
        %v965 = vpop.trf.xlu0
        %v966 = vpop.trf.xlu0
        %v967 = vpop.trf.xlu0
        %v968 = vpop.trf.xlu0
        %969 = vxpose.xlu0.c.b16.start [1/8] %v938, 128
        %970 = vxpose.xlu0.c.b16.cont [2/8] 0, 128
        %971 = vxpose.xlu0.c.b16.cont [3/8] 0, 128
        %972 = vxpose.xlu0.c.b16.cont [4/8] 0, 128
        %973 = vxpose.xlu0.c.b16.cont [5/8] 0, 128
        %974 = vxpose.xlu0.c.b16.cont [6/8] 0, 128
        %975 = vxpose.xlu0.c.b16.cont [7/8] 0, 128
        %976 = vxpose.xlu0.c.b16.end [8/8] 0, 128
        %v977 = vpop.trf.xlu0
        %v978 = vpop.trf.xlu0
        %v979 = vpop.trf.xlu0
        %v980 = vpop.trf.xlu0
        %v981 = vpop.trf.xlu0
        %v982 = vpop.trf.xlu0
        %v983 = vpop.trf.xlu0
        %v984 = vpop.trf.xlu0
        %985 = vxpose.xlu0.c.b16.start [1/8] %v939, 128
        %986 = vxpose.xlu0.c.b16.cont [2/8] 0, 128
        %987 = vxpose.xlu0.c.b16.cont [3/8] 0, 128
        %988 = vxpose.xlu0.c.b16.cont [4/8] 0, 128
        %989 = vxpose.xlu0.c.b16.cont [5/8] 0, 128
        %990 = vxpose.xlu0.c.b16.cont [6/8] 0, 128
        %991 = vxpose.xlu0.c.b16.cont [7/8] 0, 128
        %992 = vxpose.xlu0.c.b16.end [8/8] 0, 128
        %v993 = vpop.trf.xlu0
        %v994 = vpop.trf.xlu0
        %v995 = vpop.trf.xlu0
        %v996 = vpop.trf.xlu0
        %v997 = vpop.trf.xlu0
        %v998 = vpop.trf.xlu0
        %v999 = vpop.trf.xlu0
        %v1000 = vpop.trf.xlu0
        %1001 = vxpose.xlu0.c.b16.start [1/8] %v940, 128
        %1002 = vxpose.xlu0.c.b16.cont [2/8] 0, 128
        %1003 = vxpose.xlu0.c.b16.cont [3/8] 0, 128
        %1004 = vxpose.xlu0.c.b16.cont [4/8] 0, 128
        %1005 = vxpose.xlu0.c.b16.cont [5/8] 0, 128
        %1006 = vxpose.xlu0.c.b16.cont [6/8] 0, 128
        %1007 = vxpose.xlu0.c.b16.cont [7/8] 0, 128
        %1008 = vxpose.xlu0.c.b16.end [8/8] 0, 128
        %v1009 = vpop.trf.xlu0
        %v1010 = vpop.trf.xlu0
        %v1011 = vpop.trf.xlu0
        %v1012 = vpop.trf.xlu0
        %v1013 = vpop.trf.xlu0
        %v1014 = vpop.trf.xlu0
        %v1015 = vpop.trf.xlu0
        %v1016 = vpop.trf.xlu0
        %1017 = vxpose.xlu0.c.b16.start [1/8] %v941, 128
        %1018 = vxpose.xlu0.c.b16.cont [2/8] 0, 128
        %1019 = vxpose.xlu0.c.b16.cont [3/8] 0, 128
        %1020 = vxpose.xlu0.c.b16.cont [4/8] 0, 128
        %1021 = vxpose.xlu0.c.b16.cont [5/8] 0, 128
        %1022 = vxpose.xlu0.c.b16.cont [6/8] 0, 128
        %1023 = vxpose.xlu0.c.b16.cont [7/8] 0, 128
        %1024 = vxpose.xlu0.c.b16.end [8/8] 0, 128
        %v1025 = vpop.trf.xlu0
        %v1026 = vpop.trf.xlu0
        %v1027 = vpop.trf.xlu0
        %v1028 = vpop.trf.xlu0
        %v1029 = vpop.trf.xlu0
        %v1030 = vpop.trf.xlu0
        %v1031 = vpop.trf.xlu0
        %v1032 = vpop.trf.xlu0
        %1033 = vxpose.xlu0.c.b16.start [1/8] %v942, 128
        %1034 = vxpose.xlu0.c.b16.cont [2/8] 0, 128
        %1035 = vxpose.xlu0.c.b16.cont [3/8] 0, 128
        %1036 = vxpose.xlu0.c.b16.cont [4/8] 0, 128
        %1037 = vxpose.xlu0.c.b16.cont [5/8] 0, 128
        %1038 = vxpose.xlu0.c.b16.cont [6/8] 0, 128
        %1039 = vxpose.xlu0.c.b16.cont [7/8] 0, 128
        %1040 = vxpose.xlu0.c.b16.end [8/8] 0, 128
        %v1041 = vpop.trf.xlu0
        %v1042 = vpop.trf.xlu0
        %v1043 = vpop.trf.xlu0
        %v1044 = vpop.trf.xlu0
        %v1045 = vpop.trf.xlu0
        %v1046 = vpop.trf.xlu0
        %v1047 = vpop.trf.xlu0
        %v1048 = vpop.trf.xlu0
        %1049 = vxpose.xlu0.c.b16.start [1/8] %v943, 128
        %1050 = vxpose.xlu0.c.b16.cont [2/8] 0, 128
        %1051 = vxpose.xlu0.c.b16.cont [3/8] 0, 128
        %1052 = vxpose.xlu0.c.b16.cont [4/8] 0, 128
        %1053 = vxpose.xlu0.c.b16.cont [5/8] 0, 128
        %1054 = vxpose.xlu0.c.b16.cont [6/8] 0, 128
        %1055 = vxpose.xlu0.c.b16.cont [7/8] 0, 128
        %1056 = vxpose.xlu0.c.b16.end [8/8] 0, 128
        %v1057 = vpop.trf.xlu0
        %v1058 = vpop.trf.xlu0
        %v1059 = vpop.trf.xlu0
        %v1060 = vpop.trf.xlu0
        %v1061 = vpop.trf.xlu0
        %v1062 = vpop.trf.xlu0
        %v1063 = vpop.trf.xlu0
        %v1064 = vpop.trf.xlu0
        %1065 = vxpose.xlu0.c.b16.start [1/8] %v944, 128
        %1066 = vxpose.xlu0.c.b16.cont [2/8] 0, 128
        %1067 = vxpose.xlu0.c.b16.cont [3/8] 0, 128
        %1068 = vxpose.xlu0.c.b16.cont [4/8] 0, 128
        %1069 = vxpose.xlu0.c.b16.cont [5/8] 0, 128
        %1070 = vxpose.xlu0.c.b16.cont [6/8] 0, 128
        %1071 = vxpose.xlu0.c.b16.cont [7/8] 0, 128
        %1072 = vxpose.xlu0.c.b16.end [8/8] 0, 128
        %v1073 = vpop.trf.xlu0
        %v1074 = vpop.trf.xlu0
        %v1075 = vpop.trf.xlu0
        %v1076 = vpop.trf.xlu0
        %v1077 = vpop.trf.xlu0
        %v1078 = vpop.trf.xlu0
        %v1079 = vpop.trf.xlu0
        %v1080 = vpop.trf.xlu0
        %v1081 = vld [vmem:[%s3] sm:$0xf]
        %v1090 = vcombine.low %v961, %v977
        %v1091 = vcombine.low %v993, %v1009
        %v1092 = vcombine.low %v1025, %v1041
        %v1093 = vcombine.low %v1057, %v1073
        %v1095 = vunpack.c.l.s4 1966171168
        %v1096 = vunpack.c.0.s8 %v1095
        %v1097 = vlaneseq
        %v1098 = vshrl.u32 %v1097, 7
        %v1099 = vsub.s32 %v1096, %v1098
        %v1100 = vrot.slane %v1090, %v1099
        %v1102 = vunpack.c.l.s4 1966171168
        %v1103 = vunpack.c.0.s8 %v1102
        %v1104 = vlaneseq
        %v1105 = vshrl.u32 %v1104, 7
        %v1106 = vsub.s32 %v1103, %v1105
        %v1107 = vrot.slane %v1091, %v1106
        %v1109 = vunpack.c.l.s4 1966171168
        %v1110 = vunpack.c.0.s8 %v1109
        %v1111 = vlaneseq
        %v1112 = vshrl.u32 %v1111, 7
        %v1113 = vsub.s32 %v1110, %v1112
        %v1114 = vrot.slane %v1092, %v1113
        %v1116 = vunpack.c.l.s4 1966171168
        %v1117 = vunpack.c.0.s8 %v1116
        %v1118 = vlaneseq
        %v1119 = vshrl.u32 %v1118, 7
        %v1120 = vsub.s32 %v1117, %v1119
        %v1121 = vrot.slane %v1093, %v1120
        %v1122 = vcombine.low %v1100, %v1107
        %v1123 = vcombine.low %v1114, %v1121
        %v1125 = vunpack.c.l.s4 1966171168
        %v1126 = vunpack.c.0.s8 %v1125
        %v1127 = vlaneseq
        %v1128 = vshrl.u32 %v1127, 7
        %v1129 = vsub.s32 %v1126, %v1128
        %v1130 = vrot.slane %v1122, %v1129
        %v1132 = vunpack.c.l.s4 1966171168
        %v1133 = vunpack.c.0.s8 %v1132
        %v1134 = vlaneseq
        %v1135 = vshrl.u32 %v1134, 7
        %v1136 = vsub.s32 %v1133, %v1135
        %v1137 = vrot.slane %v1123, %v1136
        %v1138 = vcombine.low %v1130, %v1137
        %vm1139 = vcmask 64512
        %v1141 = vsel %vm1139, %v1138, 0
        %v1144 = vsel %vm844, %v1081, 0
        %1146 = vmatprep.subr.bf16.mxu0 0
        %1147 = vmatpush1.bf16.msra.mxu0 %v1144
        %1148 = vmatprep.subr.bf16.mxu0 0
        %1149 = vmatpush1.bf16.msra.mxu0 0
        %1150 = vmatprep.subr.bf16.mxu0 0
        %1151 = vmatpush1.bf16.msra.mxu0 0
        %1152 = vmatprep.subr.bf16.mxu0 0
        %1153 = vmatpush1.bf16.msra.mxu0 0
        %1154 = vmatprep.subr.bf16.mxu0 0
        %1155 = vmatpush1.bf16.msra.mxu0 0
        %1156 = vmatprep.subr.bf16.mxu0 0
        %1157 = vmatpush1.bf16.msra.mxu0 0
        %1158 = vmatprep.subr.bf16.mxu0 0
        %1159 = vmatpush1.bf16.msra.mxu0 0
        %1160 = vmatprep.subr.bf16.mxu0 0
        %1161 = vmatpush1.bf16.msra.mxu0 0
        %1162 = vmatprep.subr.bf16.mxu0 0
        %1163 = vmatpush1.bf16.msra.mxu0 0
        %1164 = vmatprep.subr.bf16.mxu0 0
        %1165 = vmatpush1.bf16.msra.mxu0 0
        %1166 = vmatprep.subr.bf16.mxu0 0
        %1167 = vmatpush1.bf16.msra.mxu0 0
        %1168 = vmatprep.subr.bf16.mxu0 0
        %1169 = vmatpush1.bf16.msra.mxu0 0
        %1170 = vmatprep.subr.bf16.mxu0 0
        %1171 = vmatpush1.bf16.msra.mxu0 0
        %1172 = vmatprep.subr.bf16.mxu0 0
        %1173 = vmatpush1.bf16.msra.mxu0 0
        %1174 = vmatprep.subr.bf16.mxu0 0
        %1175 = vmatpush1.bf16.msra.mxu0 0
        %1176 = vmatprep.subr.bf16.mxu0 0
        %1177 = vmatpush1.bf16.msra.mxu0 0
        %1178 = vmatprep.mubr.bf16.mxu0 0
        %1179 = vmatmul.mubr.bf16.gmra.mrb[0].mxu0 %v1141
        %v1180 = vpop.f32.mrb[0].mxu0
        %v1181 = vadd.f32 0.0, %v1180
        %v1182 = vpop.f32.mrb[0].mxu0
        %v1183 = vpop.f32.mrb[0].mxu0
        %v1184 = vadd.f32 0.0, %v1183
        %v1185 = vpop.f32.mrb[0].mxu0
        %1186 = vdwg.mxu0
        %1187 = vst [vmem:[#allocation3] sm:$0xff] %v1181
        %1188 = vst [vmem:[#allocation3 + $0x8] sm:$0xff] %v1184
        %1189 = vrot.lane.b32.xlu0 %v937, 126
        %v1190 = vpop.permute.xlu0 %1189
        %1191 = vrot.lane.b32.xlu0 %v938, 126
        %v1192 = vpop.permute.xlu0 %1191
        %1193 = vrot.lane.b32.xlu0 %v939, 126
        %v1194 = vpop.permute.xlu0 %1193
        %1195 = vrot.lane.b32.xlu0 %v940, 126
        %v1196 = vpop.permute.xlu0 %1195
        %1197 = vrot.lane.b32.xlu0 %v941, 126
        %v1198 = vpop.permute.xlu0 %1197
        %1199 = vrot.lane.b32.xlu0 %v942, 126
        %v1200 = vpop.permute.xlu0 %1199
        %1201 = vrot.lane.b32.xlu0 %v943, 126
        %v1202 = vpop.permute.xlu0 %1201
        %1203 = vrot.lane.b32.xlu0 %v944, 126
        %v1204 = vpop.permute.xlu0 %1203
        %1213 = vxpose.xlu0.c.b16.start [1/8] %v1190, 128
        %1214 = vxpose.xlu0.c.b16.cont [2/8] 0, 128
        %1215 = vxpose.xlu0.c.b16.cont [3/8] 0, 128
        %1216 = vxpose.xlu0.c.b16.cont [4/8] 0, 128
        %1217 = vxpose.xlu0.c.b16.cont [5/8] 0, 128
        %1218 = vxpose.xlu0.c.b16.cont [6/8] 0, 128
        %1219 = vxpose.xlu0.c.b16.cont [7/8] 0, 128
        %1220 = vxpose.xlu0.c.b16.end [8/8] 0, 128
        %v1221 = vpop.trf.xlu0
        %v1222 = vpop.trf.xlu0
        %v1223 = vpop.trf.xlu0
        %v1224 = vpop.trf.xlu0
        %v1225 = vpop.trf.xlu0
        %v1226 = vpop.trf.xlu0
        %v1227 = vpop.trf.xlu0
        %v1228 = vpop.trf.xlu0
        %1229 = vxpose.xlu0.c.b16.start [1/8] %v1192, 128
        %1230 = vxpose.xlu0.c.b16.cont [2/8] 0, 128
        %1231 = vxpose.xlu0.c.b16.cont [3/8] 0, 128
        %1232 = vxpose.xlu0.c.b16.cont [4/8] 0, 128
        %1233 = vxpose.xlu0.c.b16.cont [5/8] 0, 128
        %1234 = vxpose.xlu0.c.b16.cont [6/8] 0, 128
        %1235 = vxpose.xlu0.c.b16.cont [7/8] 0, 128
        %1236 = vxpose.xlu0.c.b16.end [8/8] 0, 128
        %v1237 = vpop.trf.xlu0
        %v1238 = vpop.trf.xlu0
        %v1239 = vpop.trf.xlu0
        %v1240 = vpop.trf.xlu0
        %v1241 = vpop.trf.xlu0
        %v1242 = vpop.trf.xlu0
        %v1243 = vpop.trf.xlu0
        %v1244 = vpop.trf.xlu0
        %1245 = vxpose.xlu0.c.b16.start [1/8] %v1194, 128
        %1246 = vxpose.xlu0.c.b16.cont [2/8] 0, 128
        %1247 = vxpose.xlu0.c.b16.cont [3/8] 0, 128
        %1248 = vxpose.xlu0.c.b16.cont [4/8] 0, 128
        %1249 = vxpose.xlu0.c.b16.cont [5/8] 0, 128
        %1250 = vxpose.xlu0.c.b16.cont [6/8] 0, 128
        %1251 = vxpose.xlu0.c.b16.cont [7/8] 0, 128
        %1252 = vxpose.xlu0.c.b16.end [8/8] 0, 128
        %v1253 = vpop.trf.xlu0
        %v1254 = vpop.trf.xlu0
        %v1255 = vpop.trf.xlu0
        %v1256 = vpop.trf.xlu0
        %v1257 = vpop.trf.xlu0
        %v1258 = vpop.trf.xlu0
        %v1259 = vpop.trf.xlu0
        %v1260 = vpop.trf.xlu0
        %1261 = vxpose.xlu0.c.b16.start [1/8] %v1196, 128
        %1262 = vxpose.xlu0.c.b16.cont [2/8] 0, 128
        %1263 = vxpose.xlu0.c.b16.cont [3/8] 0, 128
        %1264 = vxpose.xlu0.c.b16.cont [4/8] 0, 128
        %1265 = vxpose.xlu0.c.b16.cont [5/8] 0, 128
        %1266 = vxpose.xlu0.c.b16.cont [6/8] 0, 128
        %1267 = vxpose.xlu0.c.b16.cont [7/8] 0, 128
        %1268 = vxpose.xlu0.c.b16.end [8/8] 0, 128
        %v1269 = vpop.trf.xlu0
        %v1270 = vpop.trf.xlu0
        %v1271 = vpop.trf.xlu0
        %v1272 = vpop.trf.xlu0
        %v1273 = vpop.trf.xlu0
        %v1274 = vpop.trf.xlu0
        %v1275 = vpop.trf.xlu0
        %v1276 = vpop.trf.xlu0
        %1277 = vxpose.xlu0.c.b16.start [1/8] %v1198, 128
        %1278 = vxpose.xlu0.c.b16.cont [2/8] 0, 128
        %1279 = vxpose.xlu0.c.b16.cont [3/8] 0, 128
        %1280 = vxpose.xlu0.c.b16.cont [4/8] 0, 128
        %1281 = vxpose.xlu0.c.b16.cont [5/8] 0, 128
        %1282 = vxpose.xlu0.c.b16.cont [6/8] 0, 128
        %1283 = vxpose.xlu0.c.b16.cont [7/8] 0, 128
        %1284 = vxpose.xlu0.c.b16.end [8/8] 0, 128
        %v1285 = vpop.trf.xlu0
        %v1286 = vpop.trf.xlu0
        %v1287 = vpop.trf.xlu0
        %v1288 = vpop.trf.xlu0
        %v1289 = vpop.trf.xlu0
        %v1290 = vpop.trf.xlu0
        %v1291 = vpop.trf.xlu0
        %v1292 = vpop.trf.xlu0
        %1293 = vxpose.xlu0.c.b16.start [1/8] %v1200, 128
        %1294 = vxpose.xlu0.c.b16.cont [2/8] 0, 128
        %1295 = vxpose.xlu0.c.b16.cont [3/8] 0, 128
        %1296 = vxpose.xlu0.c.b16.cont [4/8] 0, 128
        %1297 = vxpose.xlu0.c.b16.cont [5/8] 0, 128
        %1298 = vxpose.xlu0.c.b16.cont [6/8] 0, 128
        %1299 = vxpose.xlu0.c.b16.cont [7/8] 0, 128
        %1300 = vxpose.xlu0.c.b16.end [8/8] 0, 128
        %v1301 = vpop.trf.xlu0
        %v1302 = vpop.trf.xlu0
        %v1303 = vpop.trf.xlu0
        %v1304 = vpop.trf.xlu0
        %v1305 = vpop.trf.xlu0
        %v1306 = vpop.trf.xlu0
        %v1307 = vpop.trf.xlu0
        %v1308 = vpop.trf.xlu0
        %1309 = vxpose.xlu0.c.b16.start [1/8] %v1202, 128
        %1310 = vxpose.xlu0.c.b16.cont [2/8] 0, 128
        %1311 = vxpose.xlu0.c.b16.cont [3/8] 0, 128
        %1312 = vxpose.xlu0.c.b16.cont [4/8] 0, 128
        %1313 = vxpose.xlu0.c.b16.cont [5/8] 0, 128
        %1314 = vxpose.xlu0.c.b16.cont [6/8] 0, 128
        %1315 = vxpose.xlu0.c.b16.cont [7/8] 0, 128
        %1316 = vxpose.xlu0.c.b16.end [8/8] 0, 128
        %v1317 = vpop.trf.xlu0
        %v1318 = vpop.trf.xlu0
        %v1319 = vpop.trf.xlu0
        %v1320 = vpop.trf.xlu0
        %v1321 = vpop.trf.xlu0
        %v1322 = vpop.trf.xlu0
        %v1323 = vpop.trf.xlu0
        %v1324 = vpop.trf.xlu0
        %1325 = vxpose.xlu0.c.b16.start [1/8] %v1204, 128
        %1326 = vxpose.xlu0.c.b16.cont [2/8] 0, 128
        %1327 = vxpose.xlu0.c.b16.cont [3/8] 0, 128
        %1328 = vxpose.xlu0.c.b16.cont [4/8] 0, 128
        %1329 = vxpose.xlu0.c.b16.cont [5/8] 0, 128
        %1330 = vxpose.xlu0.c.b16.cont [6/8] 0, 128
        %1331 = vxpose.xlu0.c.b16.cont [7/8] 0, 128
        %1332 = vxpose.xlu0.c.b16.end [8/8] 0, 128
        %v1333 = vpop.trf.xlu0
        %v1334 = vpop.trf.xlu0
        %v1335 = vpop.trf.xlu0
        %v1336 = vpop.trf.xlu0
        %v1337 = vpop.trf.xlu0
        %v1338 = vpop.trf.xlu0
        %v1339 = vpop.trf.xlu0
        %v1340 = vpop.trf.xlu0
        %s1341 = scalar_lea.vmem %s3, 4
        %v1342 = vld [vmem:[%s1341] sm:$0xf]
        %v1351 = vcombine.low %v1221, %v1237
        %v1352 = vcombine.low %v1253, %v1269
        %v1353 = vcombine.low %v1285, %v1301
        %v1354 = vcombine.low %v1317, %v1333
        %v1356 = vunpack.c.l.s4 1966171168
        %v1357 = vunpack.c.0.s8 %v1356
        %v1358 = vlaneseq
        %v1359 = vshrl.u32 %v1358, 7
        %v1360 = vsub.s32 %v1357, %v1359
        %v1361 = vrot.slane %v1351, %v1360
        %v1363 = vunpack.c.l.s4 1966171168
        %v1364 = vunpack.c.0.s8 %v1363
        %v1365 = vlaneseq
        %v1366 = vshrl.u32 %v1365, 7
        %v1367 = vsub.s32 %v1364, %v1366
        %v1368 = vrot.slane %v1352, %v1367
        %v1370 = vunpack.c.l.s4 1966171168
        %v1371 = vunpack.c.0.s8 %v1370
        %v1372 = vlaneseq
        %v1373 = vshrl.u32 %v1372, 7
        %v1374 = vsub.s32 %v1371, %v1373
        %v1375 = vrot.slane %v1353, %v1374
        %v1377 = vunpack.c.l.s4 1966171168
        %v1378 = vunpack.c.0.s8 %v1377
        %v1379 = vlaneseq
        %v1380 = vshrl.u32 %v1379, 7
        %v1381 = vsub.s32 %v1378, %v1380
        %v1382 = vrot.slane %v1354, %v1381
        %v1383 = vcombine.low %v1361, %v1368
        %v1384 = vcombine.low %v1375, %v1382
        %v1386 = vunpack.c.l.s4 1966171168
        %v1387 = vunpack.c.0.s8 %v1386
        %v1388 = vlaneseq
        %v1389 = vshrl.u32 %v1388, 7
        %v1390 = vsub.s32 %v1387, %v1389
        %v1391 = vrot.slane %v1383, %v1390
        %v1393 = vunpack.c.l.s4 1966171168
        %v1394 = vunpack.c.0.s8 %v1393
        %v1395 = vlaneseq
        %v1396 = vshrl.u32 %v1395, 7
        %v1397 = vsub.s32 %v1394, %v1396
        %v1398 = vrot.slane %v1384, %v1397
        %v1399 = vcombine.low %v1391, %v1398
        %v1401 = vsel %vm1139, %v1399, 0
        %v1404 = vsel %vm844, %v1342, 0
        %1406 = vmatprep.subr.bf16.mxu0 0
        %1407 = vmatpush1.bf16.msra.mxu0 %v1404
        %1408 = vmatprep.subr.bf16.mxu0 0
        %1409 = vmatpush1.bf16.msra.mxu0 0
        %1410 = vmatprep.subr.bf16.mxu0 0
        %1411 = vmatpush1.bf16.msra.mxu0 0
        %1412 = vmatprep.subr.bf16.mxu0 0
        %1413 = vmatpush1.bf16.msra.mxu0 0
        %1414 = vmatprep.subr.bf16.mxu0 0
        %1415 = vmatpush1.bf16.msra.mxu0 0
        %1416 = vmatprep.subr.bf16.mxu0 0
        %1417 = vmatpush1.bf16.msra.mxu0 0
        %1418 = vmatprep.subr.bf16.mxu0 0
        %1419 = vmatpush1.bf16.msra.mxu0 0
        %1420 = vmatprep.subr.bf16.mxu0 0
        %1421 = vmatpush1.bf16.msra.mxu0 0
        %1422 = vmatprep.subr.bf16.mxu0 0
        %1423 = vmatpush1.bf16.msra.mxu0 0
        %1424 = vmatprep.subr.bf16.mxu0 0
        %1425 = vmatpush1.bf16.msra.mxu0 0
        %1426 = vmatprep.subr.bf16.mxu0 0
        %1427 = vmatpush1.bf16.msra.mxu0 0
        %1428 = vmatprep.subr.bf16.mxu0 0
        %1429 = vmatpush1.bf16.msra.mxu0 0
        %1430 = vmatprep.subr.bf16.mxu0 0
        %1431 = vmatpush1.bf16.msra.mxu0 0
        %1432 = vmatprep.subr.bf16.mxu0 0
        %1433 = vmatpush1.bf16.msra.mxu0 0
        %1434 = vmatprep.subr.bf16.mxu0 0
        %1435 = vmatpush1.bf16.msra.mxu0 0
        %1436 = vmatprep.subr.bf16.mxu0 0
        %1437 = vmatpush1.bf16.msra.mxu0 0
        %1438 = vmatprep.mubr.bf16.mxu0 0
        %1439 = vmatmul.mubr.bf16.gmra.mrb[0].mxu0 %v1401
        %v1440 = vpop.f32.mrb[0].mxu0
        %v1441 = vadd.f32 0.0, %v1440
        %v1442 = vpop.f32.mrb[0].mxu0
        %v1443 = vpop.f32.mrb[0].mxu0
        %v1444 = vadd.f32 0.0, %v1443
        %v1445 = vpop.f32.mrb[0].mxu0
        %1446 = vdwg.mxu0
        %v1447 = vld [vmem:[#allocation3] sm:$0xff]
        %v1448 = vld [vmem:[#allocation3 + $0x8] sm:$0xff]
        %v1449 = vadd.f32 %v1447, %v1441
        %v1450 = vadd.f32 %v1448, %v1444
        %1451 = vst [vmem:[#allocation3] sm:$0xff] %v1449
        %1452 = vst [vmem:[#allocation3 + $0x8] sm:$0xff] %v1450
        %v1453 = vld [vmem:[#allocation3] sm:$0xff]
        %v1454 = vld [vmem:[#allocation3 + $0x8] sm:$0xff]
        %v1457 = vcombine.high %v1453, %v1453
        %v1459 = vunpack.c.l.s4 1983009808
        %v1460 = vunpack.c.0.s8 %v1459
        %v1461 = vlaneseq
        %v1462 = vshrl.u32 %v1461, 7
        %v1463 = vsub.s32 %v1460, %v1462
        %v1464 = vrot.slane %v1453, %v1463
        %v1466 = vunpack.c.l.s4 1983009808
        %v1467 = vunpack.c.0.s8 %v1466
        %v1468 = vlaneseq
        %v1469 = vshrl.u32 %v1468, 7
        %v1470 = vsub.s32 %v1467, %v1469
        %v1471 = vrot.slane %v1457, %v1470
        %v1472 = vcombine.high %v1464, %v1464
        %v1473 = vcombine.high %v1471, %v1471
        %v1474 = vcombine.high %v1454, %v1454
        %v1476 = vunpack.c.l.s4 1983009808
        %v1477 = vunpack.c.0.s8 %v1476
        %v1478 = vlaneseq
        %v1479 = vshrl.u32 %v1478, 7
        %v1480 = vsub.s32 %v1477, %v1479
        %v1481 = vrot.slane %v1454, %v1480
        %v1483 = vunpack.c.l.s4 1983009808
        %v1484 = vunpack.c.0.s8 %v1483
        %v1485 = vlaneseq
        %v1486 = vshrl.u32 %v1485, 7
        %v1487 = vsub.s32 %v1484, %v1486
        %v1488 = vrot.slane %v1474, %v1487
        %v1489 = vcombine.high %v1481, %v1481
        %v1490 = vcombine.high %v1488, %v1488
        %v1499 = vpack.c.bf16 %v1464, %v1464
        %v1500 = vpack.c.bf16 %v1472, %v1472
        %v1501 = vpack.c.bf16 %v1471, %v1471
        %v1502 = vpack.c.bf16 %v1473, %v1473
        %v1503 = vpack.c.bf16 %v1481, %v1481
        %v1504 = vpack.c.bf16 %v1489, %v1489
        %v1505 = vpack.c.bf16 %v1488, %v1488
        %v1506 = vpack.c.bf16 %v1490, %v1490
        %1507 = vst [vmem:[%s204] sm:$0x1] %v1499
        %1508 = vst [vmem:[%s204 + $0x2] sm:$0x1] %v1500
        %1509 = vst [vmem:[%s204 + $0x4] sm:$0x1] %v1501
        %1510 = vst [vmem:[%s204 + $0x6] sm:$0x1] %v1502
        %1511 = vst [vmem:[%s204 + $0x8] sm:$0x1] %v1503
        %1512 = vst [vmem:[%s204 + $0xa] sm:$0x1] %v1504
        %1513 = vst [vmem:[%s204 + $0xc] sm:$0x1] %v1505
        %1514 = vst [vmem:[%s204 + $0xe] sm:$0x1] %v1506
        %v1515 = vld [vmem:[%s512] sm:$0xf]
        %v1516 = vld [vmem:[%s512 + $0x8] sm:$0xf]
        %v1517 = vld [vmem:[%s512 + $0x10] sm:$0xf]
        %v1518 = vld [vmem:[%s512 + $0x18] sm:$0xf]
        %v1519 = vld [vmem:[%s512 + $0x20] sm:$0xf]
        %v1520 = vld [vmem:[%s512 + $0x28] sm:$0xf]
        %v1521 = vld [vmem:[%s512 + $0x30] sm:$0xf]
        %v1522 = vld [vmem:[%s512 + $0x38] sm:$0xf]
        %v1531 = vunpack.c.l.b16 %v1515
        %v1532 = vunpack.c.l.b16 %v1516
        %v1533 = vunpack.c.l.b16 %v1517
        %v1534 = vunpack.c.l.b16 %v1518
        %v1535 = vunpack.c.l.b16 %v1519
        %v1536 = vunpack.c.l.b16 %v1520
        %v1537 = vunpack.c.l.b16 %v1521
        %v1538 = vunpack.c.l.b16 %v1522
        %v1539 = vpack.c.b16 %v1532, %v1531
        %v1540 = vpack.c.b16 %v1534, %v1533
        %v1541 = vpack.c.b16 %v1536, %v1535
        %v1542 = vpack.c.b16 %v1538, %v1537
        %s1547 = scalar_lea.vmem [#allocation2], 32
        %1548 = vst.msk [vmem:[%s1547] sm:$0xff] %vm248, %v1539
        %1549 = vst.msk [vmem:[%s1547 + $0x8] sm:$0xff] %vm248, %v1540
        %1550 = vst.msk [vmem:[%s1547 + $0x10] sm:$0xff] %vm248, %v1541
        %1551 = vst.msk [vmem:[%s1547 + $0x18] sm:$0xff] %vm248, %v1542
        %v1552 = vld [vmem:[%s512] sm:$0xf]
        %v1553 = vld [vmem:[%s512 + $0x4] sm:$0x1]
        %v1554 = vld [vmem:[%s512 + $0x8] sm:$0xf]
        %v1555 = vld [vmem:[%s512 + $0xc] sm:$0x1]
        %v1556 = vld [vmem:[%s512 + $0x10] sm:$0xf]
        %v1557 = vld [vmem:[%s512 + $0x14] sm:$0x1]
        %v1558 = vld [vmem:[%s512 + $0x18] sm:$0xf]
        %v1559 = vld [vmem:[%s512 + $0x1c] sm:$0x1]
        %v1560 = vld [vmem:[%s512 + $0x20] sm:$0xf]
        %v1561 = vld [vmem:[%s512 + $0x24] sm:$0x1]
        %v1562 = vld [vmem:[%s512 + $0x28] sm:$0xf]
        %v1563 = vld [vmem:[%s512 + $0x2c] sm:$0x1]
        %v1564 = vld [vmem:[%s512 + $0x30] sm:$0xf]
        %v1565 = vld [vmem:[%s512 + $0x34] sm:$0x1]
        %v1566 = vld [vmem:[%s512 + $0x38] sm:$0xf]
        %v1567 = vld [vmem:[%s512 + $0x3c] sm:$0x1]
        %v1569 = vshrl.u32 %v1552, 16
        %v1571 = vrot.slane %v1569, 4
        %v1572 = vshll.u32 %v1552, 16
        %v1574 = vrot.slane %v1572, 5
        %v1575 = vor.u32 %v1571, %v1574
        %v1576 = vrot.slane %v1575, 4
        %v1578 = vshll.u32 %v1553, 16
        %v1580 = vrot.slane %v1578, 5
        %v1581 = vsel %vm271, %v1576, %v1580
        %v1583 = vshrl.u32 %v1554, 16
        %v1585 = vrot.slane %v1583, 4
        %v1586 = vshll.u32 %v1554, 16
        %v1588 = vrot.slane %v1586, 5
        %v1589 = vor.u32 %v1585, %v1588
        %v1590 = vrot.slane %v1589, 4
        %v1592 = vshll.u32 %v1555, 16
        %v1594 = vrot.slane %v1592, 5
        %v1595 = vsel %vm271, %v1590, %v1594
        %v1597 = vshrl.u32 %v1556, 16
        %v1599 = vrot.slane %v1597, 4
        %v1600 = vshll.u32 %v1556, 16
        %v1602 = vrot.slane %v1600, 5
        %v1603 = vor.u32 %v1599, %v1602
        %v1604 = vrot.slane %v1603, 4
        %v1606 = vshll.u32 %v1557, 16
        %v1608 = vrot.slane %v1606, 5
        %v1609 = vsel %vm271, %v1604, %v1608
        %v1611 = vshrl.u32 %v1558, 16
        %v1613 = vrot.slane %v1611, 4
        %v1614 = vshll.u32 %v1558, 16
        %v1616 = vrot.slane %v1614, 5
        %v1617 = vor.u32 %v1613, %v1616
        %v1618 = vrot.slane %v1617, 4
        %v1620 = vshll.u32 %v1559, 16
        %v1622 = vrot.slane %v1620, 5
        %v1623 = vsel %vm271, %v1618, %v1622
        %v1625 = vshrl.u32 %v1560, 16
        %v1627 = vrot.slane %v1625, 4
        %v1628 = vshll.u32 %v1560, 16
        %v1630 = vrot.slane %v1628, 5
        %v1631 = vor.u32 %v1627, %v1630
        %v1632 = vrot.slane %v1631, 4
        %v1634 = vshll.u32 %v1561, 16
        %v1636 = vrot.slane %v1634, 5
        %v1637 = vsel %vm271, %v1632, %v1636
        %v1639 = vshrl.u32 %v1562, 16
        %v1641 = vrot.slane %v1639, 4
        %v1642 = vshll.u32 %v1562, 16
        %v1644 = vrot.slane %v1642, 5
        %v1645 = vor.u32 %v1641, %v1644
        %v1646 = vrot.slane %v1645, 4
        %v1648 = vshll.u32 %v1563, 16
        %v1650 = vrot.slane %v1648, 5
        %v1651 = vsel %vm271, %v1646, %v1650
        %v1653 = vshrl.u32 %v1564, 16
        %v1655 = vrot.slane %v1653, 4
        %v1656 = vshll.u32 %v1564, 16
        %v1658 = vrot.slane %v1656, 5
        %v1659 = vor.u32 %v1655, %v1658
        %v1660 = vrot.slane %v1659, 4
        %v1662 = vshll.u32 %v1565, 16
        %v1664 = vrot.slane %v1662, 5
        %v1665 = vsel %vm271, %v1660, %v1664
        %v1667 = vshrl.u32 %v1566, 16
        %v1669 = vrot.slane %v1667, 4
        %v1670 = vshll.u32 %v1566, 16
        %v1672 = vrot.slane %v1670, 5
        %v1673 = vor.u32 %v1669, %v1672
        %v1674 = vrot.slane %v1673, 4
        %v1676 = vshll.u32 %v1567, 16
        %v1678 = vrot.slane %v1676, 5
        %v1679 = vsel %vm271, %v1674, %v1678
        %v1680 = vunpack.c.l.b16 %v1581
        %v1681 = vunpack.c.l.b16 %v1595
        %v1682 = vunpack.c.l.b16 %v1609
        %v1683 = vunpack.c.l.b16 %v1623
        %v1684 = vunpack.c.l.b16 %v1637
        %v1685 = vunpack.c.l.b16 %v1651
        %v1686 = vunpack.c.l.b16 %v1665
        %v1687 = vunpack.c.l.b16 %v1679
        %v1688 = vpack.c.b16 %v1681, %v1680
        %v1689 = vpack.c.b16 %v1683, %v1682
        %v1690 = vpack.c.b16 %v1685, %v1684
        %v1691 = vpack.c.b16 %v1687, %v1686
        %1692 = vrot.lane.b32.xlu0 %v1688, 4
        %v1693 = vpop.permute.xlu0 %1692
        %1694 = vrot.lane.b32.xlu0 %v1689, 4
        %v1695 = vpop.permute.xlu0 %1694
        %1696 = vrot.lane.b32.xlu0 %v1690, 4
        %v1697 = vpop.permute.xlu0 %1696
        %1698 = vrot.lane.b32.xlu0 %v1691, 4
        %v1699 = vpop.permute.xlu0 %1698
        %1704 = vst.msk [vmem:[%s1547] sm:$0xff] %vm408, %v1693
        %1705 = vst.msk [vmem:[%s1547 + $0x8] sm:$0xff] %vm408, %v1695
        %1706 = vst.msk [vmem:[%s1547 + $0x10] sm:$0xff] %vm408, %v1697
        %1707 = vst.msk [vmem:[%s1547 + $0x18] sm:$0xff] %vm408, %v1699
        %v1708 = vld [vmem:[%s512] sm:$0xe]
        %v1709 = vld [vmem:[%s512 + $0x4] sm:$0x1]
        %v1710 = vld [vmem:[%s512 + $0x8] sm:$0xe]
        %v1711 = vld [vmem:[%s512 + $0xc] sm:$0x1]
        %v1712 = vld [vmem:[%s512 + $0x10] sm:$0xe]
        %v1713 = vld [vmem:[%s512 + $0x14] sm:$0x1]
        %v1714 = vld [vmem:[%s512 + $0x18] sm:$0xe]
        %v1715 = vld [vmem:[%s512 + $0x1c] sm:$0x1]
        %v1716 = vld [vmem:[%s512 + $0x20] sm:$0xe]
        %v1717 = vld [vmem:[%s512 + $0x24] sm:$0x1]
        %v1718 = vld [vmem:[%s512 + $0x28] sm:$0xe]
        %v1719 = vld [vmem:[%s512 + $0x2c] sm:$0x1]
        %v1720 = vld [vmem:[%s512 + $0x30] sm:$0xe]
        %v1721 = vld [vmem:[%s512 + $0x34] sm:$0x1]
        %v1722 = vld [vmem:[%s512 + $0x38] sm:$0xe]
        %v1723 = vld [vmem:[%s512 + $0x3c] sm:$0x1]
        %v1740 = vrot.slane %v1708, 5
        %v1741 = vrot.slane %v1740, 4
        %v1742 = vrot.slane %v1709, 5
        %v1743 = vsel %vm447, %v1741, %v1742
        %v1744 = vrot.slane %v1710, 5
        %v1745 = vrot.slane %v1744, 4
        %v1746 = vrot.slane %v1711, 5
        %v1747 = vsel %vm447, %v1745, %v1746
        %v1748 = vrot.slane %v1712, 5
        %v1749 = vrot.slane %v1748, 4
        %v1750 = vrot.slane %v1713, 5
        %v1751 = vsel %vm447, %v1749, %v1750
        %v1752 = vrot.slane %v1714, 5
        %v1753 = vrot.slane %v1752, 4
        %v1754 = vrot.slane %v1715, 5
        %v1755 = vsel %vm447, %v1753, %v1754
        %v1756 = vrot.slane %v1716, 5
        %v1757 = vrot.slane %v1756, 4
        %v1758 = vrot.slane %v1717, 5
        %v1759 = vsel %vm447, %v1757, %v1758
        %v1760 = vrot.slane %v1718, 5
        %v1761 = vrot.slane %v1760, 4
        %v1762 = vrot.slane %v1719, 5
        %v1763 = vsel %vm447, %v1761, %v1762
        %v1764 = vrot.slane %v1720, 5
        %v1765 = vrot.slane %v1764, 4
        %v1766 = vrot.slane %v1721, 5
        %v1767 = vsel %vm447, %v1765, %v1766
        %v1768 = vrot.slane %v1722, 5
        %v1769 = vrot.slane %v1768, 4
        %v1770 = vrot.slane %v1723, 5
        %v1771 = vsel %vm447, %v1769, %v1770
        %v1772 = vunpack.c.l.b16 %v1743
        %v1773 = vunpack.c.l.b16 %v1747
        %v1774 = vunpack.c.l.b16 %v1751
        %v1775 = vunpack.c.l.b16 %v1755
        %v1776 = vunpack.c.l.b16 %v1759
        %v1777 = vunpack.c.l.b16 %v1763
        %v1778 = vunpack.c.l.b16 %v1767
        %v1779 = vunpack.c.l.b16 %v1771
        %v1780 = vpack.c.b16 %v1773, %v1772
        %v1781 = vpack.c.b16 %v1775, %v1774
        %v1782 = vpack.c.b16 %v1777, %v1776
        %v1783 = vpack.c.b16 %v1779, %v1778
        %1784 = vrot.lane.b32.xlu0 %v1780, 8
        %v1785 = vpop.permute.xlu0 %1784
        %1786 = vrot.lane.b32.xlu0 %v1781, 8
        %v1787 = vpop.permute.xlu0 %1786
        %1788 = vrot.lane.b32.xlu0 %v1782, 8
        %v1789 = vpop.permute.xlu0 %1788
        %1790 = vrot.lane.b32.xlu0 %v1783, 8
        %v1791 = vpop.permute.xlu0 %1790
        %1796 = vst.msk [vmem:[%s1547] sm:$0xff] %vm504, %v1785
        %1797 = vst.msk [vmem:[%s1547 + $0x8] sm:$0xff] %vm504, %v1787
        %1798 = vst.msk [vmem:[%s1547 + $0x10] sm:$0xff] %vm504, %v1789
        %1799 = vst.msk [vmem:[%s1547 + $0x18] sm:$0xff] %vm504, %v1791
        %s1800 = sadd.s32 %s212, 2
        %s1801 = smul.u32 %s1800, 2
        %s1802 = smul.addr %s1801, 4
        %s1803 = scalar_lea.vmem %s209, %s1802
        %v1804 = vld [vmem:[%s1803] sm:$0xf]
        %v1805 = vld [vmem:[%s1803 + $0x8] sm:$0xf]
        %v1806 = vld [vmem:[%s1803 + $0x10] sm:$0xf]
        %v1807 = vld [vmem:[%s1803 + $0x18] sm:$0xf]
        %v1808 = vld [vmem:[%s1803 + $0x20] sm:$0xf]
        %v1809 = vld [vmem:[%s1803 + $0x28] sm:$0xf]
        %v1810 = vld [vmem:[%s1803 + $0x30] sm:$0xf]
        %v1811 = vld [vmem:[%s1803 + $0x38] sm:$0xf]
        %v1820 = vunpack.c.l.b16 %v1804
        %v1821 = vunpack.c.l.b16 %v1805
        %v1822 = vunpack.c.l.b16 %v1806
        %v1823 = vunpack.c.l.b16 %v1807
        %v1824 = vunpack.c.l.b16 %v1808
        %v1825 = vunpack.c.l.b16 %v1809
        %v1826 = vunpack.c.l.b16 %v1810
        %v1827 = vunpack.c.l.b16 %v1811
        %v1828 = vpack.c.b16 %v1821, %v1820
        %v1829 = vpack.c.b16 %v1823, %v1822
        %v1830 = vpack.c.b16 %v1825, %v1824
        %v1831 = vpack.c.b16 %v1827, %v1826
        %1832 = vrot.lane.b32.xlu0 %v1828, 12
        %v1833 = vpop.permute.xlu0 %1832
        %1834 = vrot.lane.b32.xlu0 %v1829, 12
        %v1835 = vpop.permute.xlu0 %1834
        %1836 = vrot.lane.b32.xlu0 %v1830, 12
        %v1837 = vpop.permute.xlu0 %1836
        %1838 = vrot.lane.b32.xlu0 %v1831, 12
        %v1839 = vpop.permute.xlu0 %1838
        %1844 = vst.msk [vmem:[%s1547] sm:$0xff] %vm553, %v1833
        %1845 = vst.msk [vmem:[%s1547 + $0x8] sm:$0xff] %vm553, %v1835
        %1846 = vst.msk [vmem:[%s1547 + $0x10] sm:$0xff] %vm553, %v1837
        %1847 = vst.msk [vmem:[%s1547 + $0x18] sm:$0xff] %vm553, %v1839
        %v1848 = vld [vmem:[%s1803] sm:$0xf]
        %v1849 = vld [vmem:[%s1803 + $0x4] sm:$0x1]
        %v1850 = vld [vmem:[%s1803 + $0x8] sm:$0xf]
        %v1851 = vld [vmem:[%s1803 + $0xc] sm:$0x1]
        %v1852 = vld [vmem:[%s1803 + $0x10] sm:$0xf]
        %v1853 = vld [vmem:[%s1803 + $0x14] sm:$0x1]
        %v1854 = vld [vmem:[%s1803 + $0x18] sm:$0xf]
        %v1855 = vld [vmem:[%s1803 + $0x1c] sm:$0x1]
        %v1856 = vld [vmem:[%s1803 + $0x20] sm:$0xf]
        %v1857 = vld [vmem:[%s1803 + $0x24] sm:$0x1]
        %v1858 = vld [vmem:[%s1803 + $0x28] sm:$0xf]
        %v1859 = vld [vmem:[%s1803 + $0x2c] sm:$0x1]
        %v1860 = vld [vmem:[%s1803 + $0x30] sm:$0xf]
        %v1861 = vld [vmem:[%s1803 + $0x34] sm:$0x1]
        %v1862 = vld [vmem:[%s1803 + $0x38] sm:$0xf]
        %v1863 = vld [vmem:[%s1803 + $0x3c] sm:$0x1]
        %v1865 = vshrl.u32 %v1848, 16
        %v1867 = vrot.slane %v1865, 4
        %v1868 = vshll.u32 %v1848, 16
        %v1870 = vrot.slane %v1868, 5
        %v1871 = vor.u32 %v1867, %v1870
        %v1872 = vrot.slane %v1871, 4
        %v1874 = vshll.u32 %v1849, 16
        %v1876 = vrot.slane %v1874, 5
        %v1877 = vsel %vm271, %v1872, %v1876
        %v1879 = vshrl.u32 %v1850, 16
        %v1881 = vrot.slane %v1879, 4
        %v1882 = vshll.u32 %v1850, 16
        %v1884 = vrot.slane %v1882, 5
        %v1885 = vor.u32 %v1881, %v1884
        %v1886 = vrot.slane %v1885, 4
        %v1888 = vshll.u32 %v1851, 16
        %v1890 = vrot.slane %v1888, 5
        %v1891 = vsel %vm271, %v1886, %v1890
        %v1893 = vshrl.u32 %v1852, 16
        %v1895 = vrot.slane %v1893, 4
        %v1896 = vshll.u32 %v1852, 16
        %v1898 = vrot.slane %v1896, 5
        %v1899 = vor.u32 %v1895, %v1898
        %v1900 = vrot.slane %v1899, 4
        %v1902 = vshll.u32 %v1853, 16
        %v1904 = vrot.slane %v1902, 5
        %v1905 = vsel %vm271, %v1900, %v1904
        %v1907 = vshrl.u32 %v1854, 16
        %v1909 = vrot.slane %v1907, 4
        %v1910 = vshll.u32 %v1854, 16
        %v1912 = vrot.slane %v1910, 5
        %v1913 = vor.u32 %v1909, %v1912
        %v1914 = vrot.slane %v1913, 4
        %v1916 = vshll.u32 %v1855, 16
        %v1918 = vrot.slane %v1916, 5
        %v1919 = vsel %vm271, %v1914, %v1918
        %v1921 = vshrl.u32 %v1856, 16
        %v1923 = vrot.slane %v1921, 4
        %v1924 = vshll.u32 %v1856, 16
        %v1926 = vrot.slane %v1924, 5
        %v1927 = vor.u32 %v1923, %v1926
        %v1928 = vrot.slane %v1927, 4
        %v1930 = vshll.u32 %v1857, 16
        %v1932 = vrot.slane %v1930, 5
        %v1933 = vsel %vm271, %v1928, %v1932
        %v1935 = vshrl.u32 %v1858, 16
        %v1937 = vrot.slane %v1935, 4
        %v1938 = vshll.u32 %v1858, 16
        %v1940 = vrot.slane %v1938, 5
        %v1941 = vor.u32 %v1937, %v1940
        %v1942 = vrot.slane %v1941, 4
        %v1944 = vshll.u32 %v1859, 16
        %v1946 = vrot.slane %v1944, 5
        %v1947 = vsel %vm271, %v1942, %v1946
        %v1949 = vshrl.u32 %v1860, 16
        %v1951 = vrot.slane %v1949, 4
        %v1952 = vshll.u32 %v1860, 16
        %v1954 = vrot.slane %v1952, 5
        %v1955 = vor.u32 %v1951, %v1954
        %v1956 = vrot.slane %v1955, 4
        %v1958 = vshll.u32 %v1861, 16
        %v1960 = vrot.slane %v1958, 5
        %v1961 = vsel %vm271, %v1956, %v1960
        %v1963 = vshrl.u32 %v1862, 16
        %v1965 = vrot.slane %v1963, 4
        %v1966 = vshll.u32 %v1862, 16
        %v1968 = vrot.slane %v1966, 5
        %v1969 = vor.u32 %v1965, %v1968
        %v1970 = vrot.slane %v1969, 4
        %v1972 = vshll.u32 %v1863, 16
        %v1974 = vrot.slane %v1972, 5
        %v1975 = vsel %vm271, %v1970, %v1974
        %v1976 = vunpack.c.l.b16 %v1877
        %v1977 = vunpack.c.l.b16 %v1891
        %v1978 = vunpack.c.l.b16 %v1905
        %v1979 = vunpack.c.l.b16 %v1919
        %v1980 = vunpack.c.l.b16 %v1933
        %v1981 = vunpack.c.l.b16 %v1947
        %v1982 = vunpack.c.l.b16 %v1961
        %v1983 = vunpack.c.l.b16 %v1975
        %v1984 = vpack.c.b16 %v1977, %v1976
        %v1985 = vpack.c.b16 %v1979, %v1978
        %v1986 = vpack.c.b16 %v1981, %v1980
        %v1987 = vpack.c.b16 %v1983, %v1982
        %1988 = vrot.lane.b32.xlu0 %v1984, 16
        %v1989 = vpop.permute.xlu0 %1988
        %1990 = vrot.lane.b32.xlu0 %v1985, 16
        %v1991 = vpop.permute.xlu0 %1990
        %1992 = vrot.lane.b32.xlu0 %v1986, 16
        %v1993 = vpop.permute.xlu0 %1992
        %1994 = vrot.lane.b32.xlu0 %v1987, 16
        %v1995 = vpop.permute.xlu0 %1994
        %2000 = vst.msk [vmem:[%s1547] sm:$0xff] %vm710, %v1989
        %2001 = vst.msk [vmem:[%s1547 + $0x8] sm:$0xff] %vm710, %v1991
        %2002 = vst.msk [vmem:[%s1547 + $0x10] sm:$0xff] %vm710, %v1993
        %2003 = vst.msk [vmem:[%s1547 + $0x18] sm:$0xff] %vm710, %v1995
        %v2004 = vld [vmem:[%s1803] sm:$0xe]
        %v2005 = vld [vmem:[%s1803 + $0x4] sm:$0x1]
        %v2006 = vld [vmem:[%s1803 + $0x8] sm:$0xe]
        %v2007 = vld [vmem:[%s1803 + $0xc] sm:$0x1]
        %v2008 = vld [vmem:[%s1803 + $0x10] sm:$0xe]
        %v2009 = vld [vmem:[%s1803 + $0x14] sm:$0x1]
        %v2010 = vld [vmem:[%s1803 + $0x18] sm:$0xe]
        %v2011 = vld [vmem:[%s1803 + $0x1c] sm:$0x1]
        %v2012 = vld [vmem:[%s1803 + $0x20] sm:$0xe]
        %v2013 = vld [vmem:[%s1803 + $0x24] sm:$0x1]
        %v2014 = vld [vmem:[%s1803 + $0x28] sm:$0xe]
        %v2015 = vld [vmem:[%s1803 + $0x2c] sm:$0x1]
        %v2016 = vld [vmem:[%s1803 + $0x30] sm:$0xe]
        %v2017 = vld [vmem:[%s1803 + $0x34] sm:$0x1]
        %v2018 = vld [vmem:[%s1803 + $0x38] sm:$0xe]
        %v2019 = vld [vmem:[%s1803 + $0x3c] sm:$0x1]
        %v2036 = vrot.slane %v2004, 5
        %v2037 = vrot.slane %v2036, 4
        %v2038 = vrot.slane %v2005, 5
        %v2039 = vsel %vm447, %v2037, %v2038
        %v2040 = vrot.slane %v2006, 5
        %v2041 = vrot.slane %v2040, 4
        %v2042 = vrot.slane %v2007, 5
        %v2043 = vsel %vm447, %v2041, %v2042
        %v2044 = vrot.slane %v2008, 5
        %v2045 = vrot.slane %v2044, 4
        %v2046 = vrot.slane %v2009, 5
        %v2047 = vsel %vm447, %v2045, %v2046
        %v2048 = vrot.slane %v2010, 5
        %v2049 = vrot.slane %v2048, 4
        %v2050 = vrot.slane %v2011, 5
        %v2051 = vsel %vm447, %v2049, %v2050
        %v2052 = vrot.slane %v2012, 5
        %v2053 = vrot.slane %v2052, 4
        %v2054 = vrot.slane %v2013, 5
        %v2055 = vsel %vm447, %v2053, %v2054
        %v2056 = vrot.slane %v2014, 5
        %v2057 = vrot.slane %v2056, 4
        %v2058 = vrot.slane %v2015, 5
        %v2059 = vsel %vm447, %v2057, %v2058
        %v2060 = vrot.slane %v2016, 5
        %v2061 = vrot.slane %v2060, 4
        %v2062 = vrot.slane %v2017, 5
        %v2063 = vsel %vm447, %v2061, %v2062
        %v2064 = vrot.slane %v2018, 5
        %v2065 = vrot.slane %v2064, 4
        %v2066 = vrot.slane %v2019, 5
        %v2067 = vsel %vm447, %v2065, %v2066
        %v2068 = vunpack.c.l.b16 %v2039
        %v2069 = vunpack.c.l.b16 %v2043
        %v2070 = vunpack.c.l.b16 %v2047
        %v2071 = vunpack.c.l.b16 %v2051
        %v2072 = vunpack.c.l.b16 %v2055
        %v2073 = vunpack.c.l.b16 %v2059
        %v2074 = vunpack.c.l.b16 %v2063
        %v2075 = vunpack.c.l.b16 %v2067
        %v2076 = vpack.c.b16 %v2069, %v2068
        %v2077 = vpack.c.b16 %v2071, %v2070
        %v2078 = vpack.c.b16 %v2073, %v2072
        %v2079 = vpack.c.b16 %v2075, %v2074
        %2080 = vrot.lane.b32.xlu0 %v2076, 20
        %v2081 = vpop.permute.xlu0 %2080
        %2082 = vrot.lane.b32.xlu0 %v2077, 20
        %v2083 = vpop.permute.xlu0 %2082
        %2084 = vrot.lane.b32.xlu0 %v2078, 20
        %v2085 = vpop.permute.xlu0 %2084
        %2086 = vrot.lane.b32.xlu0 %v2079, 20
        %v2087 = vpop.permute.xlu0 %2086
        %2092 = vst.msk [vmem:[%s1547] sm:$0xff] %vm803, %v2081
        %2093 = vst.msk [vmem:[%s1547 + $0x8] sm:$0xff] %vm803, %v2083
        %2094 = vst.msk [vmem:[%s1547 + $0x10] sm:$0xff] %vm803, %v2085
        %2095 = vst.msk [vmem:[%s1547 + $0x18] sm:$0xff] %vm803, %v2087
        %v2096 = vld [vmem:[%s1547] sm:$0xff]
        %v2097 = vld [vmem:[%s1547 + $0x8] sm:$0xff]
        %v2098 = vld [vmem:[%s1547 + $0x10] sm:$0xff]
        %v2099 = vld [vmem:[%s1547 + $0x18] sm:$0xff]
        %s2100 = scalar_lea.vmem %s1, 12
        %v2101 = vld [vmem:[%s2100] sm:$0xf]
        %v2102 = vld [vmem:[%s2100 + $0x4] sm:$0xf]
        %v2103 = vld [vmem:[%s2100 + $0x8] sm:$0xf]
        %v2104 = vld [vmem:[%s2] sm:$0x1]
        %v2106 = vlaneseq
        %v2107 = vshrl.u32 %v2106, 7
        %v2108 = vsub.s32 0, %v2107
        %v2109 = vrot.slane %v2104, %v2108
        %v2114 = vunpack.c.l.b16 %v2101
        %v2115 = vunpack.c.l.b16 %v2102
        %v2116 = vunpack.c.l.b16 %v2103
        %v2117 = vpack.c.b16 %v2115, %v2114
        %v2118 = vpack.c.b16 %v2116, %v2116
        %v2121 = vsel %vm831, %v2096, 0
        %v2124 = vsel %vm831, %v2097, 0
        %v2127 = vsel %vm831, %v2098, 0
        %v2130 = vsel %vm831, %v2099, 0
        %v2133 = vsel %vm844, %v2118, 0
        %2135 = vmatprep.subr.bf16.mxu0 0
        %2136 = vmatpush1.bf16.msra.mxu0 %v2117
        %2137 = vmatprep.subr.bf16.mxu0 0
        %2138 = vmatpush1.bf16.msra.mxu0 %v2133
        %2139 = vmatprep.subr.bf16.mxu0 0
        %2140 = vmatpush1.bf16.msra.mxu0 0
        %2141 = vmatprep.subr.bf16.mxu0 0
        %2142 = vmatpush1.bf16.msra.mxu0 0
        %2143 = vmatprep.subr.bf16.mxu0 0
        %2144 = vmatpush1.bf16.msra.mxu0 0
        %2145 = vmatprep.subr.bf16.mxu0 0
        %2146 = vmatpush1.bf16.msra.mxu0 0
        %2147 = vmatprep.subr.bf16.mxu0 0
        %2148 = vmatpush1.bf16.msra.mxu0 0
        %2149 = vmatprep.subr.bf16.mxu0 0
        %2150 = vmatpush1.bf16.msra.mxu0 0
        %2151 = vmatprep.subr.bf16.mxu0 0
        %2152 = vmatpush1.bf16.msra.mxu0 0
        %2153 = vmatprep.subr.bf16.mxu0 0
        %2154 = vmatpush1.bf16.msra.mxu0 0
        %2155 = vmatprep.subr.bf16.mxu0 0
        %2156 = vmatpush1.bf16.msra.mxu0 0
        %2157 = vmatprep.subr.bf16.mxu0 0
        %2158 = vmatpush1.bf16.msra.mxu0 0
        %2159 = vmatprep.subr.bf16.mxu0 0
        %2160 = vmatpush1.bf16.msra.mxu0 0
        %2161 = vmatprep.subr.bf16.mxu0 0
        %2162 = vmatpush1.bf16.msra.mxu0 0
        %2163 = vmatprep.subr.bf16.mxu0 0
        %2164 = vmatpush1.bf16.msra.mxu0 0
        %2165 = vmatprep.subr.bf16.mxu0 0
        %2166 = vmatpush1.bf16.msra.mxu0 0
        %2167 = vmatprep.mubr.bf16.mxu0 0
        %2168 = vmatmul.mubr.bf16.gmra.mrb[0].mxu0 %v2121
        %v2169 = vpop.f32.mrb[0].mxu0
        %v2170 = vadd.f32 %v2109, %v2169
        %v2171 = vpop.f32.mrb[0].mxu0
        %v2172 = vpop.f32.mrb[0].mxu0
        %v2173 = vadd.f32 %v2109, %v2172
        %v2174 = vpop.f32.mrb[0].mxu0
        %2175 = vmatprep.mubr.bf16.mxu0 0
        %2176 = vmatmul.mubr.bf16.gmra.mrb[0].mxu0 %v2124
        %v2177 = vpop.f32.mrb[0].mxu0
        %v2178 = vadd.f32 %v2109, %v2177
        %v2179 = vpop.f32.mrb[0].mxu0
        %v2180 = vpop.f32.mrb[0].mxu0
        %v2181 = vadd.f32 %v2109, %v2180
        %v2182 = vpop.f32.mrb[0].mxu0
        %2183 = vmatprep.mubr.bf16.mxu0 0
        %2184 = vmatmul.mubr.bf16.gmra.mrb[0].mxu0 %v2127
        %v2185 = vpop.f32.mrb[0].mxu0
        %v2186 = vadd.f32 %v2109, %v2185
        %v2187 = vpop.f32.mrb[0].mxu0
        %v2188 = vpop.f32.mrb[0].mxu0
        %v2189 = vadd.f32 %v2109, %v2188
        %v2190 = vpop.f32.mrb[0].mxu0
        %2191 = vmatprep.mubr.bf16.mxu0 0
        %2192 = vmatmul.mubr.bf16.gmra.mrb[0].mxu0 %v2130
        %v2193 = vpop.f32.mrb[0].mxu0
        %v2194 = vadd.f32 %v2109, %v2193
        %v2195 = vpop.f32.mrb[0].mxu0
        %v2196 = vpop.f32.mrb[0].mxu0
        %v2197 = vadd.f32 %v2109, %v2196
        %v2198 = vpop.f32.mrb[0].mxu0
        %2199 = vdwg.mxu0
        %v2200 = vmax.f32 %v2170, 0.0
        %v2201 = vmax.f32 %v2173, 0.0
        %v2202 = vmax.f32 %v2178, 0.0
        %v2203 = vmax.f32 %v2181, 0.0
        %v2204 = vmax.f32 %v2186, 0.0
        %v2205 = vmax.f32 %v2189, 0.0
        %v2206 = vmax.f32 %v2194, 0.0
        %v2207 = vmax.f32 %v2197, 0.0
        %v2208 = vpack.c.bf16 %v2201, %v2200
        %v2209 = vpack.c.bf16 %v2203, %v2202
        %v2210 = vpack.c.bf16 %v2205, %v2204
        %v2211 = vpack.c.bf16 %v2207, %v2206
        %v2216 = vunpack.c.l.b16 %v2208
        %v2217 = vunpack.c.h.b16 %v2208
        %v2218 = vunpack.c.l.b16 %v2209
        %v2219 = vunpack.c.h.b16 %v2209
        %v2220 = vunpack.c.l.b16 %v2210
        %v2221 = vunpack.c.h.b16 %v2210
        %v2222 = vunpack.c.l.b16 %v2211
        %v2223 = vunpack.c.h.b16 %v2211
        %v2224 = vpack.c.b16 %v2216, %v2216
        %v2225 = vpack.c.b16 %v2217, %v2217
        %v2226 = vpack.c.b16 %v2218, %v2218
        %v2227 = vpack.c.b16 %v2219, %v2219
        %v2228 = vpack.c.b16 %v2220, %v2220
        %v2229 = vpack.c.b16 %v2221, %v2221
        %v2230 = vpack.c.b16 %v2222, %v2222
        %v2231 = vpack.c.b16 %v2223, %v2223
        %2240 = vxpose.xlu0.c.b16.start [1/8] %v2224, 128
        %2241 = vxpose.xlu0.c.b16.cont [2/8] 0, 128
        %2242 = vxpose.xlu0.c.b16.cont [3/8] 0, 128
        %2243 = vxpose.xlu0.c.b16.cont [4/8] 0, 128
        %2244 = vxpose.xlu0.c.b16.cont [5/8] 0, 128
        %2245 = vxpose.xlu0.c.b16.cont [6/8] 0, 128
        %2246 = vxpose.xlu0.c.b16.cont [7/8] 0, 128
        %2247 = vxpose.xlu0.c.b16.end [8/8] 0, 128
        %v2248 = vpop.trf.xlu0
        %v2249 = vpop.trf.xlu0
        %v2250 = vpop.trf.xlu0
        %v2251 = vpop.trf.xlu0
        %v2252 = vpop.trf.xlu0
        %v2253 = vpop.trf.xlu0
        %v2254 = vpop.trf.xlu0
        %v2255 = vpop.trf.xlu0
        %2256 = vxpose.xlu0.c.b16.start [1/8] %v2225, 128
        %2257 = vxpose.xlu0.c.b16.cont [2/8] 0, 128
        %2258 = vxpose.xlu0.c.b16.cont [3/8] 0, 128
        %2259 = vxpose.xlu0.c.b16.cont [4/8] 0, 128
        %2260 = vxpose.xlu0.c.b16.cont [5/8] 0, 128
        %2261 = vxpose.xlu0.c.b16.cont [6/8] 0, 128
        %2262 = vxpose.xlu0.c.b16.cont [7/8] 0, 128
        %2263 = vxpose.xlu0.c.b16.end [8/8] 0, 128
        %v2264 = vpop.trf.xlu0
        %v2265 = vpop.trf.xlu0
        %v2266 = vpop.trf.xlu0
        %v2267 = vpop.trf.xlu0
        %v2268 = vpop.trf.xlu0
        %v2269 = vpop.trf.xlu0
        %v2270 = vpop.trf.xlu0
        %v2271 = vpop.trf.xlu0
        %2272 = vxpose.xlu0.c.b16.start [1/8] %v2226, 128
        %2273 = vxpose.xlu0.c.b16.cont [2/8] 0, 128
        %2274 = vxpose.xlu0.c.b16.cont [3/8] 0, 128
        %2275 = vxpose.xlu0.c.b16.cont [4/8] 0, 128
        %2276 = vxpose.xlu0.c.b16.cont [5/8] 0, 128
        %2277 = vxpose.xlu0.c.b16.cont [6/8] 0, 128
        %2278 = vxpose.xlu0.c.b16.cont [7/8] 0, 128
        %2279 = vxpose.xlu0.c.b16.end [8/8] 0, 128
        %v2280 = vpop.trf.xlu0
        %v2281 = vpop.trf.xlu0
        %v2282 = vpop.trf.xlu0
        %v2283 = vpop.trf.xlu0
        %v2284 = vpop.trf.xlu0
        %v2285 = vpop.trf.xlu0
        %v2286 = vpop.trf.xlu0
        %v2287 = vpop.trf.xlu0
        %2288 = vxpose.xlu0.c.b16.start [1/8] %v2227, 128
        %2289 = vxpose.xlu0.c.b16.cont [2/8] 0, 128
        %2290 = vxpose.xlu0.c.b16.cont [3/8] 0, 128
        %2291 = vxpose.xlu0.c.b16.cont [4/8] 0, 128
        %2292 = vxpose.xlu0.c.b16.cont [5/8] 0, 128
        %2293 = vxpose.xlu0.c.b16.cont [6/8] 0, 128
        %2294 = vxpose.xlu0.c.b16.cont [7/8] 0, 128
        %2295 = vxpose.xlu0.c.b16.end [8/8] 0, 128
        %v2296 = vpop.trf.xlu0
        %v2297 = vpop.trf.xlu0
        %v2298 = vpop.trf.xlu0
        %v2299 = vpop.trf.xlu0
        %v2300 = vpop.trf.xlu0
        %v2301 = vpop.trf.xlu0
        %v2302 = vpop.trf.xlu0
        %v2303 = vpop.trf.xlu0
        %2304 = vxpose.xlu0.c.b16.start [1/8] %v2228, 128
        %2305 = vxpose.xlu0.c.b16.cont [2/8] 0, 128
        %2306 = vxpose.xlu0.c.b16.cont [3/8] 0, 128
        %2307 = vxpose.xlu0.c.b16.cont [4/8] 0, 128
        %2308 = vxpose.xlu0.c.b16.cont [5/8] 0, 128
        %2309 = vxpose.xlu0.c.b16.cont [6/8] 0, 128
        %2310 = vxpose.xlu0.c.b16.cont [7/8] 0, 128
        %2311 = vxpose.xlu0.c.b16.end [8/8] 0, 128
        %v2312 = vpop.trf.xlu0
        %v2313 = vpop.trf.xlu0
        %v2314 = vpop.trf.xlu0
        %v2315 = vpop.trf.xlu0
        %v2316 = vpop.trf.xlu0
        %v2317 = vpop.trf.xlu0
        %v2318 = vpop.trf.xlu0
        %v2319 = vpop.trf.xlu0
        %2320 = vxpose.xlu0.c.b16.start [1/8] %v2229, 128
        %2321 = vxpose.xlu0.c.b16.cont [2/8] 0, 128
        %2322 = vxpose.xlu0.c.b16.cont [3/8] 0, 128
        %2323 = vxpose.xlu0.c.b16.cont [4/8] 0, 128
        %2324 = vxpose.xlu0.c.b16.cont [5/8] 0, 128
        %2325 = vxpose.xlu0.c.b16.cont [6/8] 0, 128
        %2326 = vxpose.xlu0.c.b16.cont [7/8] 0, 128
        %2327 = vxpose.xlu0.c.b16.end [8/8] 0, 128
        %v2328 = vpop.trf.xlu0
        %v2329 = vpop.trf.xlu0
        %v2330 = vpop.trf.xlu0
        %v2331 = vpop.trf.xlu0
        %v2332 = vpop.trf.xlu0
        %v2333 = vpop.trf.xlu0
        %v2334 = vpop.trf.xlu0
        %v2335 = vpop.trf.xlu0
        %2336 = vxpose.xlu0.c.b16.start [1/8] %v2230, 128
        %2337 = vxpose.xlu0.c.b16.cont [2/8] 0, 128
        %2338 = vxpose.xlu0.c.b16.cont [3/8] 0, 128
        %2339 = vxpose.xlu0.c.b16.cont [4/8] 0, 128
        %2340 = vxpose.xlu0.c.b16.cont [5/8] 0, 128
        %2341 = vxpose.xlu0.c.b16.cont [6/8] 0, 128
        %2342 = vxpose.xlu0.c.b16.cont [7/8] 0, 128
        %2343 = vxpose.xlu0.c.b16.end [8/8] 0, 128
        %v2344 = vpop.trf.xlu0
        %v2345 = vpop.trf.xlu0
        %v2346 = vpop.trf.xlu0
        %v2347 = vpop.trf.xlu0
        %v2348 = vpop.trf.xlu0
        %v2349 = vpop.trf.xlu0
        %v2350 = vpop.trf.xlu0
        %v2351 = vpop.trf.xlu0
        %2352 = vxpose.xlu0.c.b16.start [1/8] %v2231, 128
        %2353 = vxpose.xlu0.c.b16.cont [2/8] 0, 128
        %2354 = vxpose.xlu0.c.b16.cont [3/8] 0, 128
        %2355 = vxpose.xlu0.c.b16.cont [4/8] 0, 128
        %2356 = vxpose.xlu0.c.b16.cont [5/8] 0, 128
        %2357 = vxpose.xlu0.c.b16.cont [6/8] 0, 128
        %2358 = vxpose.xlu0.c.b16.cont [7/8] 0, 128
        %2359 = vxpose.xlu0.c.b16.end [8/8] 0, 128
        %v2360 = vpop.trf.xlu0
        %v2361 = vpop.trf.xlu0
        %v2362 = vpop.trf.xlu0
        %v2363 = vpop.trf.xlu0
        %v2364 = vpop.trf.xlu0
        %v2365 = vpop.trf.xlu0
        %v2366 = vpop.trf.xlu0
        %v2367 = vpop.trf.xlu0
        %v2368 = vld [vmem:[%s3] sm:$0xf]
        %v2377 = vcombine.low %v2248, %v2264
        %v2378 = vcombine.low %v2280, %v2296
        %v2379 = vcombine.low %v2312, %v2328
        %v2380 = vcombine.low %v2344, %v2360
        %v2382 = vunpack.c.l.s4 1966171168
        %v2383 = vunpack.c.0.s8 %v2382
        %v2384 = vlaneseq
        %v2385 = vshrl.u32 %v2384, 7
        %v2386 = vsub.s32 %v2383, %v2385
        %v2387 = vrot.slane %v2377, %v2386
        %v2389 = vunpack.c.l.s4 1966171168
        %v2390 = vunpack.c.0.s8 %v2389
        %v2391 = vlaneseq
        %v2392 = vshrl.u32 %v2391, 7
        %v2393 = vsub.s32 %v2390, %v2392
        %v2394 = vrot.slane %v2378, %v2393
        %v2396 = vunpack.c.l.s4 1966171168
        %v2397 = vunpack.c.0.s8 %v2396
        %v2398 = vlaneseq
        %v2399 = vshrl.u32 %v2398, 7
        %v2400 = vsub.s32 %v2397, %v2399
        %v2401 = vrot.slane %v2379, %v2400
        %v2403 = vunpack.c.l.s4 1966171168
        %v2404 = vunpack.c.0.s8 %v2403
        %v2405 = vlaneseq
        %v2406 = vshrl.u32 %v2405, 7
        %v2407 = vsub.s32 %v2404, %v2406
        %v2408 = vrot.slane %v2380, %v2407
        %v2409 = vcombine.low %v2387, %v2394
        %v2410 = vcombine.low %v2401, %v2408
        %v2412 = vunpack.c.l.s4 1966171168
        %v2413 = vunpack.c.0.s8 %v2412
        %v2414 = vlaneseq
        %v2415 = vshrl.u32 %v2414, 7
        %v2416 = vsub.s32 %v2413, %v2415
        %v2417 = vrot.slane %v2409, %v2416
        %v2419 = vunpack.c.l.s4 1966171168
        %v2420 = vunpack.c.0.s8 %v2419
        %v2421 = vlaneseq
        %v2422 = vshrl.u32 %v2421, 7
        %v2423 = vsub.s32 %v2420, %v2422
        %v2424 = vrot.slane %v2410, %v2423
        %v2425 = vcombine.low %v2417, %v2424
        %v2427 = vsel %vm1139, %v2425, 0
        %v2430 = vsel %vm844, %v2368, 0
        %2432 = vmatprep.subr.bf16.mxu0 0
        %2433 = vmatpush1.bf16.msra.mxu0 %v2430
        %2434 = vmatprep.subr.bf16.mxu0 0
        %2435 = vmatpush1.bf16.msra.mxu0 0
        %2436 = vmatprep.subr.bf16.mxu0 0
        %2437 = vmatpush1.bf16.msra.mxu0 0
        %2438 = vmatprep.subr.bf16.mxu0 0
        %2439 = vmatpush1.bf16.msra.mxu0 0
        %2440 = vmatprep.subr.bf16.mxu0 0
        %2441 = vmatpush1.bf16.msra.mxu0 0
        %2442 = vmatprep.subr.bf16.mxu0 0
        %2443 = vmatpush1.bf16.msra.mxu0 0
        %2444 = vmatprep.subr.bf16.mxu0 0
        %2445 = vmatpush1.bf16.msra.mxu0 0
        %2446 = vmatprep.subr.bf16.mxu0 0
        %2447 = vmatpush1.bf16.msra.mxu0 0
        %2448 = vmatprep.subr.bf16.mxu0 0
        %2449 = vmatpush1.bf16.msra.mxu0 0
        %2450 = vmatprep.subr.bf16.mxu0 0
        %2451 = vmatpush1.bf16.msra.mxu0 0
        %2452 = vmatprep.subr.bf16.mxu0 0
        %2453 = vmatpush1.bf16.msra.mxu0 0
        %2454 = vmatprep.subr.bf16.mxu0 0
        %2455 = vmatpush1.bf16.msra.mxu0 0
        %2456 = vmatprep.subr.bf16.mxu0 0
        %2457 = vmatpush1.bf16.msra.mxu0 0
        %2458 = vmatprep.subr.bf16.mxu0 0
        %2459 = vmatpush1.bf16.msra.mxu0 0
        %2460 = vmatprep.subr.bf16.mxu0 0
        %2461 = vmatpush1.bf16.msra.mxu0 0
        %2462 = vmatprep.subr.bf16.mxu0 0
        %2463 = vmatpush1.bf16.msra.mxu0 0
        %2464 = vmatprep.mubr.bf16.mxu0 0
        %2465 = vmatmul.mubr.bf16.gmra.mrb[0].mxu0 %v2427
        %v2466 = vpop.f32.mrb[0].mxu0
        %v2467 = vadd.f32 0.0, %v2466
        %v2468 = vpop.f32.mrb[0].mxu0
        %v2469 = vpop.f32.mrb[0].mxu0
        %v2470 = vadd.f32 0.0, %v2469
        %v2471 = vpop.f32.mrb[0].mxu0
        %2472 = vdwg.mxu0
        %2473 = vst [vmem:[#allocation3] sm:$0xff] %v2467
        %2474 = vst [vmem:[#allocation3 + $0x8] sm:$0xff] %v2470
        %2475 = vrot.lane.b32.xlu0 %v2224, 126
        %v2476 = vpop.permute.xlu0 %2475
        %2477 = vrot.lane.b32.xlu0 %v2225, 126
        %v2478 = vpop.permute.xlu0 %2477
        %2479 = vrot.lane.b32.xlu0 %v2226, 126
        %v2480 = vpop.permute.xlu0 %2479
        %2481 = vrot.lane.b32.xlu0 %v2227, 126
        %v2482 = vpop.permute.xlu0 %2481
        %2483 = vrot.lane.b32.xlu0 %v2228, 126
        %v2484 = vpop.permute.xlu0 %2483
        %2485 = vrot.lane.b32.xlu0 %v2229, 126
        %v2486 = vpop.permute.xlu0 %2485
        %2487 = vrot.lane.b32.xlu0 %v2230, 126
        %v2488 = vpop.permute.xlu0 %2487
        %2489 = vrot.lane.b32.xlu0 %v2231, 126
        %v2490 = vpop.permute.xlu0 %2489
        %2499 = vxpose.xlu0.c.b16.start [1/8] %v2476, 128
        %2500 = vxpose.xlu0.c.b16.cont [2/8] 0, 128
        %2501 = vxpose.xlu0.c.b16.cont [3/8] 0, 128
        %2502 = vxpose.xlu0.c.b16.cont [4/8] 0, 128
        %2503 = vxpose.xlu0.c.b16.cont [5/8] 0, 128
        %2504 = vxpose.xlu0.c.b16.cont [6/8] 0, 128
        %2505 = vxpose.xlu0.c.b16.cont [7/8] 0, 128
        %2506 = vxpose.xlu0.c.b16.end [8/8] 0, 128
        %v2507 = vpop.trf.xlu0
        %v2508 = vpop.trf.xlu0
        %v2509 = vpop.trf.xlu0
        %v2510 = vpop.trf.xlu0
        %v2511 = vpop.trf.xlu0
        %v2512 = vpop.trf.xlu0
        %v2513 = vpop.trf.xlu0
        %v2514 = vpop.trf.xlu0
        %2515 = vxpose.xlu0.c.b16.start [1/8] %v2478, 128
        %2516 = vxpose.xlu0.c.b16.cont [2/8] 0, 128
        %2517 = vxpose.xlu0.c.b16.cont [3/8] 0, 128
        %2518 = vxpose.xlu0.c.b16.cont [4/8] 0, 128
        %2519 = vxpose.xlu0.c.b16.cont [5/8] 0, 128
        %2520 = vxpose.xlu0.c.b16.cont [6/8] 0, 128
        %2521 = vxpose.xlu0.c.b16.cont [7/8] 0, 128
        %2522 = vxpose.xlu0.c.b16.end [8/8] 0, 128
        %v2523 = vpop.trf.xlu0
        %v2524 = vpop.trf.xlu0
        %v2525 = vpop.trf.xlu0
        %v2526 = vpop.trf.xlu0
        %v2527 = vpop.trf.xlu0
        %v2528 = vpop.trf.xlu0
        %v2529 = vpop.trf.xlu0
        %v2530 = vpop.trf.xlu0
        %2531 = vxpose.xlu0.c.b16.start [1/8] %v2480, 128
        %2532 = vxpose.xlu0.c.b16.cont [2/8] 0, 128
        %2533 = vxpose.xlu0.c.b16.cont [3/8] 0, 128
        %2534 = vxpose.xlu0.c.b16.cont [4/8] 0, 128
        %2535 = vxpose.xlu0.c.b16.cont [5/8] 0, 128
        %2536 = vxpose.xlu0.c.b16.cont [6/8] 0, 128
        %2537 = vxpose.xlu0.c.b16.cont [7/8] 0, 128
        %2538 = vxpose.xlu0.c.b16.end [8/8] 0, 128
        %v2539 = vpop.trf.xlu0
        %v2540 = vpop.trf.xlu0
        %v2541 = vpop.trf.xlu0
        %v2542 = vpop.trf.xlu0
        %v2543 = vpop.trf.xlu0
        %v2544 = vpop.trf.xlu0
        %v2545 = vpop.trf.xlu0
        %v2546 = vpop.trf.xlu0
        %2547 = vxpose.xlu0.c.b16.start [1/8] %v2482, 128
        %2548 = vxpose.xlu0.c.b16.cont [2/8] 0, 128
        %2549 = vxpose.xlu0.c.b16.cont [3/8] 0, 128
        %2550 = vxpose.xlu0.c.b16.cont [4/8] 0, 128
        %2551 = vxpose.xlu0.c.b16.cont [5/8] 0, 128
        %2552 = vxpose.xlu0.c.b16.cont [6/8] 0, 128
        %2553 = vxpose.xlu0.c.b16.cont [7/8] 0, 128
        %2554 = vxpose.xlu0.c.b16.end [8/8] 0, 128
        %v2555 = vpop.trf.xlu0
        %v2556 = vpop.trf.xlu0
        %v2557 = vpop.trf.xlu0
        %v2558 = vpop.trf.xlu0
        %v2559 = vpop.trf.xlu0
        %v2560 = vpop.trf.xlu0
        %v2561 = vpop.trf.xlu0
        %v2562 = vpop.trf.xlu0
        %2563 = vxpose.xlu0.c.b16.start [1/8] %v2484, 128
        %2564 = vxpose.xlu0.c.b16.cont [2/8] 0, 128
        %2565 = vxpose.xlu0.c.b16.cont [3/8] 0, 128
        %2566 = vxpose.xlu0.c.b16.cont [4/8] 0, 128
        %2567 = vxpose.xlu0.c.b16.cont [5/8] 0, 128
        %2568 = vxpose.xlu0.c.b16.cont [6/8] 0, 128
        %2569 = vxpose.xlu0.c.b16.cont [7/8] 0, 128
        %2570 = vxpose.xlu0.c.b16.end [8/8] 0, 128
        %v2571 = vpop.trf.xlu0
        %v2572 = vpop.trf.xlu0
        %v2573 = vpop.trf.xlu0
        %v2574 = vpop.trf.xlu0
        %v2575 = vpop.trf.xlu0
        %v2576 = vpop.trf.xlu0
        %v2577 = vpop.trf.xlu0
        %v2578 = vpop.trf.xlu0
        %2579 = vxpose.xlu0.c.b16.start [1/8] %v2486, 128
        %2580 = vxpose.xlu0.c.b16.cont [2/8] 0, 128
        %2581 = vxpose.xlu0.c.b16.cont [3/8] 0, 128
        %2582 = vxpose.xlu0.c.b16.cont [4/8] 0, 128
        %2583 = vxpose.xlu0.c.b16.cont [5/8] 0, 128
        %2584 = vxpose.xlu0.c.b16.cont [6/8] 0, 128
        %2585 = vxpose.xlu0.c.b16.cont [7/8] 0, 128
        %2586 = vxpose.xlu0.c.b16.end [8/8] 0, 128
        %v2587 = vpop.trf.xlu0
        %v2588 = vpop.trf.xlu0
        %v2589 = vpop.trf.xlu0
        %v2590 = vpop.trf.xlu0
        %v2591 = vpop.trf.xlu0
        %v2592 = vpop.trf.xlu0
        %v2593 = vpop.trf.xlu0
        %v2594 = vpop.trf.xlu0
        %2595 = vxpose.xlu0.c.b16.start [1/8] %v2488, 128
        %2596 = vxpose.xlu0.c.b16.cont [2/8] 0, 128
        %2597 = vxpose.xlu0.c.b16.cont [3/8] 0, 128
        %2598 = vxpose.xlu0.c.b16.cont [4/8] 0, 128
        %2599 = vxpose.xlu0.c.b16.cont [5/8] 0, 128
        %2600 = vxpose.xlu0.c.b16.cont [6/8] 0, 128
        %2601 = vxpose.xlu0.c.b16.cont [7/8] 0, 128
        %2602 = vxpose.xlu0.c.b16.end [8/8] 0, 128
        %v2603 = vpop.trf.xlu0
        %v2604 = vpop.trf.xlu0
        %v2605 = vpop.trf.xlu0
        %v2606 = vpop.trf.xlu0
        %v2607 = vpop.trf.xlu0
        %v2608 = vpop.trf.xlu0
        %v2609 = vpop.trf.xlu0
        %v2610 = vpop.trf.xlu0
        %2611 = vxpose.xlu0.c.b16.start [1/8] %v2490, 128
        %2612 = vxpose.xlu0.c.b16.cont [2/8] 0, 128
        %2613 = vxpose.xlu0.c.b16.cont [3/8] 0, 128
        %2614 = vxpose.xlu0.c.b16.cont [4/8] 0, 128
        %2615 = vxpose.xlu0.c.b16.cont [5/8] 0, 128
        %2616 = vxpose.xlu0.c.b16.cont [6/8] 0, 128
        %2617 = vxpose.xlu0.c.b16.cont [7/8] 0, 128
        %2618 = vxpose.xlu0.c.b16.end [8/8] 0, 128
        %v2619 = vpop.trf.xlu0
        %v2620 = vpop.trf.xlu0
        %v2621 = vpop.trf.xlu0
        %v2622 = vpop.trf.xlu0
        %v2623 = vpop.trf.xlu0
        %v2624 = vpop.trf.xlu0
        %v2625 = vpop.trf.xlu0
        %v2626 = vpop.trf.xlu0
        %v2627 = vld [vmem:[%s1341] sm:$0xf]
        %v2636 = vcombine.low %v2507, %v2523
        %v2637 = vcombine.low %v2539, %v2555
        %v2638 = vcombine.low %v2571, %v2587
        %v2639 = vcombine.low %v2603, %v2619
        %v2641 = vunpack.c.l.s4 1966171168
        %v2642 = vunpack.c.0.s8 %v2641
        %v2643 = vlaneseq
        %v2644 = vshrl.u32 %v2643, 7
        %v2645 = vsub.s32 %v2642, %v2644
        %v2646 = vrot.slane %v2636, %v2645
        %v2648 = vunpack.c.l.s4 1966171168
        %v2649 = vunpack.c.0.s8 %v2648
        %v2650 = vlaneseq
        %v2651 = vshrl.u32 %v2650, 7
        %v2652 = vsub.s32 %v2649, %v2651
        %v2653 = vrot.slane %v2637, %v2652
        %v2655 = vunpack.c.l.s4 1966171168
        %v2656 = vunpack.c.0.s8 %v2655
        %v2657 = vlaneseq
        %v2658 = vshrl.u32 %v2657, 7
        %v2659 = vsub.s32 %v2656, %v2658
        %v2660 = vrot.slane %v2638, %v2659
        %v2662 = vunpack.c.l.s4 1966171168
        %v2663 = vunpack.c.0.s8 %v2662
        %v2664 = vlaneseq
        %v2665 = vshrl.u32 %v2664, 7
        %v2666 = vsub.s32 %v2663, %v2665
        %v2667 = vrot.slane %v2639, %v2666
        %v2668 = vcombine.low %v2646, %v2653
        %v2669 = vcombine.low %v2660, %v2667
        %v2671 = vunpack.c.l.s4 1966171168
        %v2672 = vunpack.c.0.s8 %v2671
        %v2673 = vlaneseq
        %v2674 = vshrl.u32 %v2673, 7
        %v2675 = vsub.s32 %v2672, %v2674
        %v2676 = vrot.slane %v2668, %v2675
        %v2678 = vunpack.c.l.s4 1966171168
        %v2679 = vunpack.c.0.s8 %v2678
        %v2680 = vlaneseq
        %v2681 = vshrl.u32 %v2680, 7
        %v2682 = vsub.s32 %v2679, %v2681
        %v2683 = vrot.slane %v2669, %v2682
        %v2684 = vcombine.low %v2676, %v2683
        %v2686 = vsel %vm1139, %v2684, 0
        %v2689 = vsel %vm844, %v2627, 0
        %2691 = vmatprep.subr.bf16.mxu0 0
        %2692 = vmatpush1.bf16.msra.mxu0 %v2689
        %2693 = vmatprep.subr.bf16.mxu0 0
        %2694 = vmatpush1.bf16.msra.mxu0 0
        %2695 = vmatprep.subr.bf16.mxu0 0
        %2696 = vmatpush1.bf16.msra.mxu0 0
        %2697 = vmatprep.subr.bf16.mxu0 0
        %2698 = vmatpush1.bf16.msra.mxu0 0
        %2699 = vmatprep.subr.bf16.mxu0 0
        %2700 = vmatpush1.bf16.msra.mxu0 0
        %2701 = vmatprep.subr.bf16.mxu0 0
        %2702 = vmatpush1.bf16.msra.mxu0 0
        %2703 = vmatprep.subr.bf16.mxu0 0
        %2704 = vmatpush1.bf16.msra.mxu0 0
        %2705 = vmatprep.subr.bf16.mxu0 0
        %2706 = vmatpush1.bf16.msra.mxu0 0
        %2707 = vmatprep.subr.bf16.mxu0 0
        %2708 = vmatpush1.bf16.msra.mxu0 0
        %2709 = vmatprep.subr.bf16.mxu0 0
        %2710 = vmatpush1.bf16.msra.mxu0 0
        %2711 = vmatprep.subr.bf16.mxu0 0
        %2712 = vmatpush1.bf16.msra.mxu0 0
        %2713 = vmatprep.subr.bf16.mxu0 0
        %2714 = vmatpush1.bf16.msra.mxu0 0
        %2715 = vmatprep.subr.bf16.mxu0 0
        %2716 = vmatpush1.bf16.msra.mxu0 0
        %2717 = vmatprep.subr.bf16.mxu0 0
        %2718 = vmatpush1.bf16.msra.mxu0 0
        %2719 = vmatprep.subr.bf16.mxu0 0
        %2720 = vmatpush1.bf16.msra.mxu0 0
        %2721 = vmatprep.subr.bf16.mxu0 0
        %2722 = vmatpush1.bf16.msra.mxu0 0
        %2723 = vmatprep.mubr.bf16.mxu0 0
        %2724 = vmatmul.mubr.bf16.gmra.mrb[0].mxu0 %v2686
        %v2725 = vpop.f32.mrb[0].mxu0
        %v2726 = vadd.f32 0.0, %v2725
        %v2727 = vpop.f32.mrb[0].mxu0
        %v2728 = vpop.f32.mrb[0].mxu0
        %v2729 = vadd.f32 0.0, %v2728
        %v2730 = vpop.f32.mrb[0].mxu0
        %2731 = vdwg.mxu0
        %v2732 = vld [vmem:[#allocation3] sm:$0xff]
        %v2733 = vld [vmem:[#allocation3 + $0x8] sm:$0xff]
        %v2734 = vadd.f32 %v2732, %v2726
        %v2735 = vadd.f32 %v2733, %v2729
        %2736 = vst [vmem:[#allocation3] sm:$0xff] %v2734
        %2737 = vst [vmem:[#allocation3 + $0x8] sm:$0xff] %v2735
        %v2738 = vld [vmem:[#allocation3] sm:$0xff]
        %v2739 = vld [vmem:[#allocation3 + $0x8] sm:$0xff]
        %v2742 = vcombine.high %v2738, %v2738
        %v2744 = vunpack.c.l.s4 1983009808
        %v2745 = vunpack.c.0.s8 %v2744
        %v2746 = vlaneseq
        %v2747 = vshrl.u32 %v2746, 7
        %v2748 = vsub.s32 %v2745, %v2747
        %v2749 = vrot.slane %v2738, %v2748
        %v2751 = vunpack.c.l.s4 1983009808
        %v2752 = vunpack.c.0.s8 %v2751
        %v2753 = vlaneseq
        %v2754 = vshrl.u32 %v2753, 7
        %v2755 = vsub.s32 %v2752, %v2754
        %v2756 = vrot.slane %v2742, %v2755
        %v2757 = vcombine.high %v2749, %v2749
        %v2758 = vcombine.high %v2756, %v2756
        %v2759 = vcombine.high %v2739, %v2739
        %v2761 = vunpack.c.l.s4 1983009808
        %v2762 = vunpack.c.0.s8 %v2761
        %v2763 = vlaneseq
        %v2764 = vshrl.u32 %v2763, 7
        %v2765 = vsub.s32 %v2762, %v2764
        %v2766 = vrot.slane %v2739, %v2765
        %v2768 = vunpack.c.l.s4 1983009808
        %v2769 = vunpack.c.0.s8 %v2768
        %v2770 = vlaneseq
        %v2771 = vshrl.u32 %v2770, 7
        %v2772 = vsub.s32 %v2769, %v2771
        %v2773 = vrot.slane %v2759, %v2772
        %v2774 = vcombine.high %v2766, %v2766
        %v2775 = vcombine.high %v2773, %v2773
        %v2784 = vpack.c.bf16 %v2749, %v2749
        %v2785 = vpack.c.bf16 %v2757, %v2757
        %v2786 = vpack.c.bf16 %v2756, %v2756
        %v2787 = vpack.c.bf16 %v2758, %v2758
        %v2788 = vpack.c.bf16 %v2766, %v2766
        %v2789 = vpack.c.bf16 %v2774, %v2774
        %v2790 = vpack.c.bf16 %v2773, %v2773
        %v2791 = vpack.c.bf16 %v2775, %v2775
        %s2792 = scalar_lea.vmem %s204, 1 [#allocation4]
        %2793 = vst [vmem:[%s2792] sm:$0x1] %v2784
        %2794 = vst [vmem:[%s2792 + $0x2] sm:$0x1] %v2785
        %2795 = vst [vmem:[%s2792 + $0x4] sm:$0x1] %v2786
        %2796 = vst [vmem:[%s2792 + $0x6] sm:$0x1] %v2787
        %2797 = vst [vmem:[%s2792 + $0x8] sm:$0x1] %v2788
        %2798 = vst [vmem:[%s2792 + $0xa] sm:$0x1] %v2789
        %2799 = vst [vmem:[%s2792 + $0xc] sm:$0x1] %v2790
        %2800 = vst [vmem:[%s2792 + $0xe] sm:$0x1] %v2791
        %s2801 = sand.u32 %s129, 1
        %s2802 = scalar_lea.sflag [#allocation5], %s2801
        %s2803 = sand.u32 %s129, 1
        %s2804 = smul.addr %s2803, 16
        %s2805 = scalar_lea.vmem [#allocation4], %s2804
        // Predicated region
        $region37: #{tpu_custom_call.1} parent=35 // pred_check
          %p2806 = pneg %p139
        $region38: #{tpu_custom_call.1} parent=35 // pred_check_branch
          %2808 = sbr.rel (%p2806) target = $region40
        $region39: #{tpu_custom_call.1} parent=35 // pred_region
          %s2809 = smul.u32 8, %s23
          %s2811 = ssub.s32 256, 256
          %2812 = vsyncadd %s2802, %s2811
          %s2813 = smul.addr %s2809, 2
          %s2814 = smul.addr %s22, 16
          %s2815 = sadd.s32 %s2813, %s2814
          %s2816 = smul.addr %s2815, 16
          %s2817 = scalar_lea.hbm %s4, %s2816
          %s2818 = sshll.u32 %s2805, 4
          %s2819 = int_to_ptr.vmem [resolvable:$true] %s2818
          %2824 = dma.vmem_to_hbm [thread:$0]  %s2819, 256, %s2817, %s2802, 16, 16, 1
        $region40: #{tpu_custom_call.1} parent=35 // pred_fallthru
          _
      $region36: #{tpu_custom_call.1} parent=5 // pred_fallthru
        _
      %p2825 = scmp.le.s32.totalorder 2, %s13
      // Predicated region
      $region41: #{tpu_custom_call.1} parent=5 // pred_check
        %p2826 = pneg %p2825
      $region42: #{tpu_custom_call.1} parent=5 // pred_check_branch
        %2828 = sbr.rel (%p2826) target = $region44
      $region43: #{tpu_custom_call.1} parent=5 // pred_region
        %s2829 = ssub.s32 %s13, 2
        // Predicated region
        $region45: #{tpu_custom_call.1} parent=43 // pred_check
          %p2830 = pneg %p145
        $region46: #{tpu_custom_call.1} parent=43 // pred_check_branch
          %2832 = sbr.rel (%p2830) target = $region48
        $region47: #{tpu_custom_call.1} parent=43 // pred_region
          %s2833 = sand.u32 %s130, 1
          %s2834 = scalar_lea.sflag [#allocation5], %s2833
          %s2835 = sand.u32 %s130, 1
          %s2836 = smul.addr %s2835, 16
          %s2837 = scalar_lea.vmem [#allocation4], %s2836
          %2838 = dma.done %s2834, 256
        $region48: #{tpu_custom_call.1} parent=43 // pred_fallthru
          _
      $region44: #{tpu_custom_call.1} parent=5 // pred_fallthru
        _
    $region6: #{tpu_custom_call.1} parent=1 // loop_footer
      %s17 = sadd.s32 1, %s13
    $region7: #{tpu_custom_call.1} parent=1 // loop_footer_branch
      %12 = sbr.rel target = $region3
    $region8: #{tpu_custom_call.1} parent=1 // loop_exit
      _
    %2839 = vsyncpa [#allocation5], 1
    %s2840 = scalar_lea.sflag [#allocation5], 1
    %2841 = vsyncpa %s2840, 1

</llo_original>
